<compile_context>
chip_gen: v7x
topology: tpu7x:2x2x1
jax: 0.10.0
libtpu: 0.0.40
codegen_flags: <defaults>
</compile_context>

<pallas_src>
import functools

import jax
import jax.numpy as jnp
from jax.experimental import pallas as pl
from jax.experimental.pallas import tpu as pltpu


def _sigmoid_tanh(x):
    # sigmoid(x) == 0.5 * (1 + tanh(x/2)); one EUP tanh + VPU mul/add.
    return 0.5 * jnp.tanh(0.5 * x) + 0.5


def _lstm_clf_kernel(x_ref, wih_ref, whh_ref, bg_ref, wclf_ref, bclf_ref,
                     out_ref, *, seq_len, batch):
    """Single-invocation fused LSTM + Linear classifier.

    x_ref:    (T*B, D)   bf16 time-major flattened input
    wih_ref:  (D, 4H)    bf16, gate columns reordered to [i, f, o, g]
    whh_ref:  (H, 4H)    bf16, gate columns reordered to [i, f, o, g]
    bg_ref:   (1, 4H)    f32  (b_ih + b_hh), reordered to [i, f, o, g]
    wclf_ref: (H, Cp)    bf16 classifier weight, lane-padded to 128
    bclf_ref: (1, Cp)    f32  classifier bias, lane-padded
    out_ref:  (T*B, Cp)  f32 logits, lane-dense
    """
    B = batch
    H = whh_ref.shape[0]

    # ---- Phase 1: hoisted input projection, one bf16 MXU matmul, f32 acc.
    # gx stays register/VMEM-value resident: (T*B, 4H) f32 is tiny here.
    gx = jnp.dot(x_ref[...], wih_ref[...],
                 preferred_element_type=jnp.float32) + bg_ref[...]

    # ---- Phase 2: recurrence, fully unrolled (T is small & static).  Only
    # h @ W_hh sits on the serial dependency chain; bf16 operands halve the
    # MXU passes.  Elementwise gate math stays f32.
    h = jnp.zeros((B, H), jnp.float32)
    c = jnp.zeros((B, H), jnp.float32)
    h_b = h.astype(jnp.bfloat16)
    hs = []
    for t in range(seq_len):                       # static -> static slices
        gates = gx[t * B:(t + 1) * B, :] + jnp.dot(
            h_b, whh_ref[...], preferred_element_type=jnp.float32)  # (B, 4H)
        # Columns are [i, f, o, g]: one sigmoid slab, one tanh slab.
        sg = _sigmoid_tanh(gates[:, 0:3 * H])
        i_g = sg[:, 0 * H:1 * H]
        f_g = sg[:, 1 * H:2 * H]
        o_g = sg[:, 2 * H:3 * H]
        g_g = jnp.tanh(gates[:, 3 * H:4 * H])
        c = f_g * c + i_g * g_g
        h = o_g * jnp.tanh(c)
        h_b = h.astype(jnp.bfloat16)               # MXU operand for next step
        hs.append(h)                               # keep f32, register-resident

    # TODO(synk): nn.Dropout(p=0.5) is identity in eval mode; training-mode
    # dropout (pltpu.prng_random_bits mask over hs) is not emitted here.

    # ---- Phase 3: classifier over all hidden states at once (time-major),
    # lane-dense output (Cp = 128) -> single unmasked store.
    hs_all = jnp.concatenate(hs, axis=0).astype(jnp.bfloat16)   # (T*B, H)
    out_ref[...] = (jnp.dot(hs_all, wclf_ref[...],
                            preferred_element_type=jnp.float32)
                    + bclf_ref[...]).astype(out_ref.dtype)


def _reorder_gates(w):
    """Permute the 4H gate axis from PyTorch [i, f, g, o] to [i, f, o, g]."""
    i, f, g, o = jnp.split(w, 4, axis=-1)
    return jnp.concatenate([i, f, o, g], axis=-1)


@jax.jit
def classifier_forward(x, w_ih, w_hh, b_gates, w_clf, b_clf):
    """x: (B, T, D) float32 (batch_first, like PyTorch). Returns logits (B, T, C)."""
    B, T, D = x.shape
    H = w_hh.shape[0]
    C = w_clf.shape[1]
    C_pad = ((C + 127) // 128) * 128               # lane-dense output width

    # Time-major flat layout so step t occupies rows [t*B, (t+1)*B).
    x_flat = jnp.transpose(x, (1, 0, 2)).reshape(T * B, D).astype(jnp.bfloat16)

    # One-time weight prep: gate-column reorder + bf16 MXU operands.
    w_ih_r = _reorder_gates(w_ih).astype(jnp.bfloat16)
    w_hh_r = _reorder_gates(w_hh).astype(jnp.bfloat16)
    bg_r = _reorder_gates(b_gates)                 # stays f32 (added post-MXU)
    w_clf_p = jnp.pad(w_clf, ((0, 0), (0, C_pad - C))).astype(jnp.bfloat16)
    b_clf_p = jnp.pad(b_clf, ((0, 0), (0, C_pad - C)))

    kernel = functools.partial(_lstm_clf_kernel, seq_len=T, batch=B)

    def vmem_spec():
        return pl.BlockSpec(memory_space=pltpu.MemorySpace.VMEM)

    # Single invocation (no grid): whole arrays land in VMEM once, no
    # pointless double buffering of the weights.
    out_flat = pl.pallas_call(
        kernel,
        out_shape=jax.ShapeDtypeStruct((T * B, C_pad), jnp.float32),
        in_specs=[vmem_spec() for _ in range(6)],
        out_specs=vmem_spec(),
    )(x_flat, w_ih_r, w_hh_r, bg_r, w_clf_p, b_clf_p)

    out = out_flat[:, :C].reshape(T, B, C)         # drop lane padding
    return jnp.transpose(out, (1, 0, 2))           # (B, T, C)


def _reference_forward(x, w_ih, w_hh, b_gates, w_clf, b_clf):
    """Pure-JAX f32 reference (PyTorch LSTM semantics, eval-mode dropout)."""
    B, T, D = x.shape
    H = w_hh.shape[0]

    def step(carry, x_t):
        h, c = carry
        gates = x_t @ w_ih + h @ w_hh + b_gates[0]
        i = jax.nn.sigmoid(gates[:, 0 * H:1 * H])
        f = jax.nn.sigmoid(gates[:, 1 * H:2 * H])
        g = jnp.tanh(gates[:, 2 * H:3 * H])
        o = jax.nn.sigmoid(gates[:, 3 * H:4 * H])
        c_new = f * c + i * g
        h_new = o * jnp.tanh(c_new)
        return (h_new, c_new), h_new

    h0 = jnp.zeros((B, H), jnp.float32)
    c0 = jnp.zeros((B, H), jnp.float32)
    (_, _), hs = jax.lax.scan(step, (h0, c0), jnp.transpose(x, (1, 0, 2)))
    hs = jnp.transpose(hs, (1, 0, 2))              # (B, T, H)
    return hs @ w_clf + b_clf[0]


if __name__ == "__main__":
    # Small shapes consistent with the module:
    #   latent feature D (stand-in for 2048), n_rnn_units H, n_classes C.
    B, T, D, H, C = 2, 8, 256, 128, 5

    key = jax.random.PRNGKey(0)
    kx, k1, k2, k3, k4, k5, k6 = jax.random.split(key, 7)

    # Deterministic PyTorch-style init: U(-1/sqrt(H), 1/sqrt(H)).
    bound = 1.0 / jnp.sqrt(jnp.float32(H))
    x = jax.random.normal(kx, (B, T, D), jnp.float32)
    w_ih = jax.random.uniform(k1, (D, 4 * H), jnp.float32, -bound, bound)   # = weight_ih_l0.T
    w_hh = jax.random.uniform(k2, (H, 4 * H), jnp.float32, -bound, bound)   # = weight_hh_l0.T
    b_ih = jax.random.uniform(k3, (1, 4 * H), jnp.float32, -bound, bound)
    b_hh = jax.random.uniform(k4, (1, 4 * H), jnp.float32, -bound, bound)
    b_gates = b_ih + b_hh
    w_clf = jax.random.uniform(k5, (H, C), jnp.float32, -bound, bound)      # = clf.weight.T
    b_clf = jax.random.uniform(k6, (1, C), jnp.float32, -bound, bound)

    out = classifier_forward(x, w_ih, w_hh, b_gates, w_clf, b_clf)
    out = jax.block_until_ready(out)

    ref = _reference_forward(x, w_ih, w_hh, b_gates, w_clf, b_clf)
    assert out.shape == (B, T, C), out.shape
    # Tolerance accounts for bf16 MXU operands vs the f32 reference.
    assert jnp.allclose(out, ref, rtol=2e-2, atol=1e-2), float(jnp.max(jnp.abs(out - ref)))

    print("KERNEL_OK")
</pallas_src>

<mosaic_0001>
module attributes {stable_mosaic.version = 11 : i64} {
  func.func @_lstm_clf_kernel(%arg0: memref<16x256xbf16, #tpu.memory_space<vmem>>, %arg1: memref<256x512xbf16, #tpu.memory_space<vmem>>, %arg2: memref<128x512xbf16, #tpu.memory_space<vmem>>, %arg3: memref<1x512xf32, #tpu.memory_space<vmem>>, %arg4: memref<128x128xbf16, #tpu.memory_space<vmem>>, %arg5: memref<1x128xf32, #tpu.memory_space<vmem>>, %arg6: memref<16x128xf32, #tpu.memory_space<vmem>>) attributes {dimension_semantics = [], scalar_prefetch = 0 : i64, scratch_operands = 0 : i64, tpu.core_type = #tpu.core_type<tc>} {
    %c0 = arith.constant 0 : index
    %c0_0 = arith.constant 0 : index
    %0 = vector.load %arg0[%c0, %c0_0] : memref<16x256xbf16, #tpu.memory_space<vmem>>, vector<16x256xbf16>
    %c0_1 = arith.constant 0 : index
    %c0_2 = arith.constant 0 : index
    %1 = vector.load %arg1[%c0_1, %c0_2] : memref<256x512xbf16, #tpu.memory_space<vmem>>, vector<256x512xbf16>
    %cst = arith.constant dense<0.000000e+00> : vector<16x512xf32>
    %2 = tpu.matmul %0, %1, %cst {dimension_numbers = #tpu.dot_dimension_numbers<[1], [0], [0], [1], [0, 0, 1, 1], [], []>} : vector<16x256xbf16>, vector<256x512xbf16>, vector<16x512xf32> -> vector<16x512xf32>
    %c0_3 = arith.constant 0 : index
    %c0_4 = arith.constant 0 : index
    %3 = vector.load %arg3[%c0_3, %c0_4] : memref<1x512xf32, #tpu.memory_space<vmem>>, vector<1x512xf32>
    %4 = vector.broadcast %3 : vector<1x512xf32> to vector<16x512xf32>
    %5 = arith.addf %2, %4 : vector<16x512xf32>
    %cst_5 = arith.constant 0.000000e+00 : f32
    %6 = vector.broadcast %cst_5 : f32 to vector<2x128xf32>
    %cst_6 = arith.constant 0.000000e+00 : f32
    %7 = vector.broadcast %cst_6 : f32 to vector<2x128xf32>
    %8 = arith.truncf %6 : vector<2x128xf32> to vector<2x128xbf16>
    %9 = vector.extract_strided_slice %5 {offsets = [0, 0], sizes = [2, 512], strides = [1, 1]} : vector<16x512xf32> to vector<2x512xf32>
    %c0_7 = arith.constant 0 : index
    %c0_8 = arith.constant 0 : index
    %10 = vector.load %arg2[%c0_7, %c0_8] : memref<128x512xbf16, #tpu.memory_space<vmem>>, vector<128x512xbf16>
    %cst_9 = arith.constant dense<0.000000e+00> : vector<2x512xf32>
    %11 = tpu.matmul %8, %10, %cst_9 {dimension_numbers = #tpu.dot_dimension_numbers<[1], [0], [0], [1], [0, 0, 1, 1], [], []>} : vector<2x128xbf16>, vector<128x512xbf16>, vector<2x512xf32> -> vector<2x512xf32>
    %12 = arith.addf %9, %11 : vector<2x512xf32>
    %13 = vector.extract_strided_slice %12 {offsets = [0, 0], sizes = [2, 384], strides = [1, 1]} : vector<2x512xf32> to vector<2x384xf32>
    %cst_10 = arith.constant 5.000000e-01 : f32
    %14 = vector.broadcast %cst_10 : f32 to vector<2x384xf32>
    %15 = arith.mulf %14, %13 : vector<2x384xf32>
    %16 = math.tanh %15 : vector<2x384xf32>
    %cst_11 = arith.constant 5.000000e-01 : f32
    %17 = vector.broadcast %cst_11 : f32 to vector<2x384xf32>
    %18 = arith.mulf %17, %16 : vector<2x384xf32>
    %cst_12 = arith.constant 5.000000e-01 : f32
    %19 = vector.broadcast %cst_12 : f32 to vector<2x384xf32>
    %20 = arith.addf %18, %19 : vector<2x384xf32>
    %21 = vector.extract_strided_slice %20 {offsets = [0, 0], sizes = [2, 128], strides = [1, 1]} : vector<2x384xf32> to vector<2x128xf32>
    %22 = vector.extract_strided_slice %20 {offsets = [0, 128], sizes = [2, 128], strides = [1, 1]} : vector<2x384xf32> to vector<2x128xf32>
    %23 = vector.extract_strided_slice %20 {offsets = [0, 256], sizes = [2, 128], strides = [1, 1]} : vector<2x384xf32> to vector<2x128xf32>
    %24 = vector.extract_strided_slice %12 {offsets = [0, 384], sizes = [2, 128], strides = [1, 1]} : vector<2x512xf32> to vector<2x128xf32>
    %25 = math.tanh %24 : vector<2x128xf32>
    %26 = arith.mulf %22, %7 : vector<2x128xf32>
    %27 = arith.mulf %21, %25 : vector<2x128xf32>
    %28 = arith.addf %26, %27 : vector<2x128xf32>
    %29 = math.tanh %28 : vector<2x128xf32>
    %30 = arith.mulf %23, %29 : vector<2x128xf32>
    %31 = arith.truncf %30 : vector<2x128xf32> to vector<2x128xbf16>
    %32 = vector.extract_strided_slice %5 {offsets = [2, 0], sizes = [2, 512], strides = [1, 1]} : vector<16x512xf32> to vector<2x512xf32>
    %c0_13 = arith.constant 0 : index
    %c0_14 = arith.constant 0 : index
    %33 = vector.load %arg2[%c0_13, %c0_14] : memref<128x512xbf16, #tpu.memory_space<vmem>>, vector<128x512xbf16>
    %cst_15 = arith.constant dense<0.000000e+00> : vector<2x512xf32>
    %34 = tpu.matmul %31, %33, %cst_15 {dimension_numbers = #tpu.dot_dimension_numbers<[1], [0], [0], [1], [0, 0, 1, 1], [], []>} : vector<2x128xbf16>, vector<128x512xbf16>, vector<2x512xf32> -> vector<2x512xf32>
    %35 = arith.addf %32, %34 : vector<2x512xf32>
    %36 = vector.extract_strided_slice %35 {offsets = [0, 0], sizes = [2, 384], strides = [1, 1]} : vector<2x512xf32> to vector<2x384xf32>
    %cst_16 = arith.constant 5.000000e-01 : f32
    %37 = vector.broadcast %cst_16 : f32 to vector<2x384xf32>
    %38 = arith.mulf %37, %36 : vector<2x384xf32>
    %39 = math.tanh %38 : vector<2x384xf32>
    %cst_17 = arith.constant 5.000000e-01 : f32
    %40 = vector.broadcast %cst_17 : f32 to vector<2x384xf32>
    %41 = arith.mulf %40, %39 : vector<2x384xf32>
    %cst_18 = arith.constant 5.000000e-01 : f32
    %42 = vector.broadcast %cst_18 : f32 to vector<2x384xf32>
    %43 = arith.addf %41, %42 : vector<2x384xf32>
    %44 = vector.extract_strided_slice %43 {offsets = [0, 0], sizes = [2, 128], strides = [1, 1]} : vector<2x384xf32> to vector<2x128xf32>
    %45 = vector.extract_strided_slice %43 {offsets = [0, 128], sizes = [2, 128], strides = [1, 1]} : vector<2x384xf32> to vector<2x128xf32>
    %46 = vector.extract_strided_slice %43 {offsets = [0, 256], sizes = [2, 128], strides = [1, 1]} : vector<2x384xf32> to vector<2x128xf32>
    %47 = vector.extract_strided_slice %35 {offsets = [0, 384], sizes = [2, 128], strides = [1, 1]} : vector<2x512xf32> to vector<2x128xf32>
    %48 = math.tanh %47 : vector<2x128xf32>
    %49 = arith.mulf %45, %28 : vector<2x128xf32>
    %50 = arith.mulf %44, %48 : vector<2x128xf32>
    %51 = arith.addf %49, %50 : vector<2x128xf32>
    %52 = math.tanh %51 : vector<2x128xf32>
    %53 = arith.mulf %46, %52 : vector<2x128xf32>
    %54 = arith.truncf %53 : vector<2x128xf32> to vector<2x128xbf16>
    %55 = vector.extract_strided_slice %5 {offsets = [4, 0], sizes = [2, 512], strides = [1, 1]} : vector<16x512xf32> to vector<2x512xf32>
    %c0_19 = arith.constant 0 : index
    %c0_20 = arith.constant 0 : index
    %56 = vector.load %arg2[%c0_19, %c0_20] : memref<128x512xbf16, #tpu.memory_space<vmem>>, vector<128x512xbf16>
    %cst_21 = arith.constant dense<0.000000e+00> : vector<2x512xf32>
    %57 = tpu.matmul %54, %56, %cst_21 {dimension_numbers = #tpu.dot_dimension_numbers<[1], [0], [0], [1], [0, 0, 1, 1], [], []>} : vector<2x128xbf16>, vector<128x512xbf16>, vector<2x512xf32> -> vector<2x512xf32>
    %58 = arith.addf %55, %57 : vector<2x512xf32>
    %59 = vector.extract_strided_slice %58 {offsets = [0, 0], sizes = [2, 384], strides = [1, 1]} : vector<2x512xf32> to vector<2x384xf32>
    %cst_22 = arith.constant 5.000000e-01 : f32
    %60 = vector.broadcast %cst_22 : f32 to vector<2x384xf32>
    %61 = arith.mulf %60, %59 : vector<2x384xf32>
    %62 = math.tanh %61 : vector<2x384xf32>
    %cst_23 = arith.constant 5.000000e-01 : f32
    %63 = vector.broadcast %cst_23 : f32 to vector<2x384xf32>
    %64 = arith.mulf %63, %62 : vector<2x384xf32>
    %cst_24 = arith.constant 5.000000e-01 : f32
    %65 = vector.broadcast %cst_24 : f32 to vector<2x384xf32>
    %66 = arith.addf %64, %65 : vector<2x384xf32>
    %67 = vector.extract_strided_slice %66 {offsets = [0, 0], sizes = [2, 128], strides = [1, 1]} : vector<2x384xf32> to vector<2x128xf32>
    %68 = vector.extract_strided_slice %66 {offsets = [0, 128], sizes = [2, 128], strides = [1, 1]} : vector<2x384xf32> to vector<2x128xf32>
    %69 = vector.extract_strided_slice %66 {offsets = [0, 256], sizes = [2, 128], strides = [1, 1]} : vector<2x384xf32> to vector<2x128xf32>
    %70 = vector.extract_strided_slice %58 {offsets = [0, 384], sizes = [2, 128], strides = [1, 1]} : vector<2x512xf32> to vector<2x128xf32>
    %71 = math.tanh %70 : vector<2x128xf32>
    %72 = arith.mulf %68, %51 : vector<2x128xf32>
    %73 = arith.mulf %67, %71 : vector<2x128xf32>
    %74 = arith.addf %72, %73 : vector<2x128xf32>
    %75 = math.tanh %74 : vector<2x128xf32>
    %76 = arith.mulf %69, %75 : vector<2x128xf32>
    %77 = arith.truncf %76 : vector<2x128xf32> to vector<2x128xbf16>
    %78 = vector.extract_strided_slice %5 {offsets = [6, 0], sizes = [2, 512], strides = [1, 1]} : vector<16x512xf32> to vector<2x512xf32>
    %c0_25 = arith.constant 0 : index
    %c0_26 = arith.constant 0 : index
    %79 = vector.load %arg2[%c0_25, %c0_26] : memref<128x512xbf16, #tpu.memory_space<vmem>>, vector<128x512xbf16>
    %cst_27 = arith.constant dense<0.000000e+00> : vector<2x512xf32>
    %80 = tpu.matmul %77, %79, %cst_27 {dimension_numbers = #tpu.dot_dimension_numbers<[1], [0], [0], [1], [0, 0, 1, 1], [], []>} : vector<2x128xbf16>, vector<128x512xbf16>, vector<2x512xf32> -> vector<2x512xf32>
    %81 = arith.addf %78, %80 : vector<2x512xf32>
    %82 = vector.extract_strided_slice %81 {offsets = [0, 0], sizes = [2, 384], strides = [1, 1]} : vector<2x512xf32> to vector<2x384xf32>
    %cst_28 = arith.constant 5.000000e-01 : f32
    %83 = vector.broadcast %cst_28 : f32 to vector<2x384xf32>
    %84 = arith.mulf %83, %82 : vector<2x384xf32>
    %85 = math.tanh %84 : vector<2x384xf32>
    %cst_29 = arith.constant 5.000000e-01 : f32
    %86 = vector.broadcast %cst_29 : f32 to vector<2x384xf32>
    %87 = arith.mulf %86, %85 : vector<2x384xf32>
    %cst_30 = arith.constant 5.000000e-01 : f32
    %88 = vector.broadcast %cst_30 : f32 to vector<2x384xf32>
    %89 = arith.addf %87, %88 : vector<2x384xf32>
    %90 = vector.extract_strided_slice %89 {offsets = [0, 0], sizes = [2, 128], strides = [1, 1]} : vector<2x384xf32> to vector<2x128xf32>
    %91 = vector.extract_strided_slice %89 {offsets = [0, 128], sizes = [2, 128], strides = [1, 1]} : vector<2x384xf32> to vector<2x128xf32>
    %92 = vector.extract_strided_slice %89 {offsets = [0, 256], sizes = [2, 128], strides = [1, 1]} : vector<2x384xf32> to vector<2x128xf32>
    %93 = vector.extract_strided_slice %81 {offsets = [0, 384], sizes = [2, 128], strides = [1, 1]} : vector<2x512xf32> to vector<2x128xf32>
    %94 = math.tanh %93 : vector<2x128xf32>
    %95 = arith.mulf %91, %74 : vector<2x128xf32>
    %96 = arith.mulf %90, %94 : vector<2x128xf32>
    %97 = arith.addf %95, %96 : vector<2x128xf32>
    %98 = math.tanh %97 : vector<2x128xf32>
    %99 = arith.mulf %92, %98 : vector<2x128xf32>
    %100 = arith.truncf %99 : vector<2x128xf32> to vector<2x128xbf16>
    %101 = vector.extract_strided_slice %5 {offsets = [8, 0], sizes = [2, 512], strides = [1, 1]} : vector<16x512xf32> to vector<2x512xf32>
    %c0_31 = arith.constant 0 : index
    %c0_32 = arith.constant 0 : index
    %102 = vector.load %arg2[%c0_31, %c0_32] : memref<128x512xbf16, #tpu.memory_space<vmem>>, vector<128x512xbf16>
    %cst_33 = arith.constant dense<0.000000e+00> : vector<2x512xf32>
    %103 = tpu.matmul %100, %102, %cst_33 {dimension_numbers = #tpu.dot_dimension_numbers<[1], [0], [0], [1], [0, 0, 1, 1], [], []>} : vector<2x128xbf16>, vector<128x512xbf16>, vector<2x512xf32> -> vector<2x512xf32>
    %104 = arith.addf %101, %103 : vector<2x512xf32>
    %105 = vector.extract_strided_slice %104 {offsets = [0, 0], sizes = [2, 384], strides = [1, 1]} : vector<2x512xf32> to vector<2x384xf32>
    %cst_34 = arith.constant 5.000000e-01 : f32
    %106 = vector.broadcast %cst_34 : f32 to vector<2x384xf32>
    %107 = arith.mulf %106, %105 : vector<2x384xf32>
    %108 = math.tanh %107 : vector<2x384xf32>
    %cst_35 = arith.constant 5.000000e-01 : f32
    %109 = vector.broadcast %cst_35 : f32 to vector<2x384xf32>
    %110 = arith.mulf %109, %108 : vector<2x384xf32>
    %cst_36 = arith.constant 5.000000e-01 : f32
    %111 = vector.broadcast %cst_36 : f32 to vector<2x384xf32>
    %112 = arith.addf %110, %111 : vector<2x384xf32>
    %113 = vector.extract_strided_slice %112 {offsets = [0, 0], sizes = [2, 128], strides = [1, 1]} : vector<2x384xf32> to vector<2x128xf32>
    %114 = vector.extract_strided_slice %112 {offsets = [0, 128], sizes = [2, 128], strides = [1, 1]} : vector<2x384xf32> to vector<2x128xf32>
    %115 = vector.extract_strided_slice %112 {offsets = [0, 256], sizes = [2, 128], strides = [1, 1]} : vector<2x384xf32> to vector<2x128xf32>
    %116 = vector.extract_strided_slice %104 {offsets = [0, 384], sizes = [2, 128], strides = [1, 1]} : vector<2x512xf32> to vector<2x128xf32>
    %117 = math.tanh %116 : vector<2x128xf32>
    %118 = arith.mulf %114, %97 : vector<2x128xf32>
    %119 = arith.mulf %113, %117 : vector<2x128xf32>
    %120 = arith.addf %118, %119 : vector<2x128xf32>
    %121 = math.tanh %120 : vector<2x128xf32>
    %122 = arith.mulf %115, %121 : vector<2x128xf32>
    %123 = arith.truncf %122 : vector<2x128xf32> to vector<2x128xbf16>
    %124 = vector.extract_strided_slice %5 {offsets = [10, 0], sizes = [2, 512], strides = [1, 1]} : vector<16x512xf32> to vector<2x512xf32>
    %c0_37 = arith.constant 0 : index
    %c0_38 = arith.constant 0 : index
    %125 = vector.load %arg2[%c0_37, %c0_38] : memref<128x512xbf16, #tpu.memory_space<vmem>>, vector<128x512xbf16>
    %cst_39 = arith.constant dense<0.000000e+00> : vector<2x512xf32>
    %126 = tpu.matmul %123, %125, %cst_39 {dimension_numbers = #tpu.dot_dimension_numbers<[1], [0], [0], [1], [0, 0, 1, 1], [], []>} : vector<2x128xbf16>, vector<128x512xbf16>, vector<2x512xf32> -> vector<2x512xf32>
    %127 = arith.addf %124, %126 : vector<2x512xf32>
    %128 = vector.extract_strided_slice %127 {offsets = [0, 0], sizes = [2, 384], strides = [1, 1]} : vector<2x512xf32> to vector<2x384xf32>
    %cst_40 = arith.constant 5.000000e-01 : f32
    %129 = vector.broadcast %cst_40 : f32 to vector<2x384xf32>
    %130 = arith.mulf %129, %128 : vector<2x384xf32>
    %131 = math.tanh %130 : vector<2x384xf32>
    %cst_41 = arith.constant 5.000000e-01 : f32
    %132 = vector.broadcast %cst_41 : f32 to vector<2x384xf32>
    %133 = arith.mulf %132, %131 : vector<2x384xf32>
    %cst_42 = arith.constant 5.000000e-01 : f32
    %134 = vector.broadcast %cst_42 : f32 to vector<2x384xf32>
    %135 = arith.addf %133, %134 : vector<2x384xf32>
    %136 = vector.extract_strided_slice %135 {offsets = [0, 0], sizes = [2, 128], strides = [1, 1]} : vector<2x384xf32> to vector<2x128xf32>
    %137 = vector.extract_strided_slice %135 {offsets = [0, 128], sizes = [2, 128], strides = [1, 1]} : vector<2x384xf32> to vector<2x128xf32>
    %138 = vector.extract_strided_slice %135 {offsets = [0, 256], sizes = [2, 128], strides = [1, 1]} : vector<2x384xf32> to vector<2x128xf32>
    %139 = vector.extract_strided_slice %127 {offsets = [0, 384], sizes = [2, 128], strides = [1, 1]} : vector<2x512xf32> to vector<2x128xf32>
    %140 = math.tanh %139 : vector<2x128xf32>
    %141 = arith.mulf %137, %120 : vector<2x128xf32>
    %142 = arith.mulf %136, %140 : vector<2x128xf32>
    %143 = arith.addf %141, %142 : vector<2x128xf32>
    %144 = math.tanh %143 : vector<2x128xf32>
    %145 = arith.mulf %138, %144 : vector<2x128xf32>
    %146 = arith.truncf %145 : vector<2x128xf32> to vector<2x128xbf16>
    %147 = vector.extract_strided_slice %5 {offsets = [12, 0], sizes = [2, 512], strides = [1, 1]} : vector<16x512xf32> to vector<2x512xf32>
    %c0_43 = arith.constant 0 : index
    %c0_44 = arith.constant 0 : index
    %148 = vector.load %arg2[%c0_43, %c0_44] : memref<128x512xbf16, #tpu.memory_space<vmem>>, vector<128x512xbf16>
    %cst_45 = arith.constant dense<0.000000e+00> : vector<2x512xf32>
    %149 = tpu.matmul %146, %148, %cst_45 {dimension_numbers = #tpu.dot_dimension_numbers<[1], [0], [0], [1], [0, 0, 1, 1], [], []>} : vector<2x128xbf16>, vector<128x512xbf16>, vector<2x512xf32> -> vector<2x512xf32>
    %150 = arith.addf %147, %149 : vector<2x512xf32>
    %151 = vector.extract_strided_slice %150 {offsets = [0, 0], sizes = [2, 384], strides = [1, 1]} : vector<2x512xf32> to vector<2x384xf32>
    %cst_46 = arith.constant 5.000000e-01 : f32
    %152 = vector.broadcast %cst_46 : f32 to vector<2x384xf32>
    %153 = arith.mulf %152, %151 : vector<2x384xf32>
    %154 = math.tanh %153 : vector<2x384xf32>
    %cst_47 = arith.constant 5.000000e-01 : f32
    %155 = vector.broadcast %cst_47 : f32 to vector<2x384xf32>
    %156 = arith.mulf %155, %154 : vector<2x384xf32>
    %cst_48 = arith.constant 5.000000e-01 : f32
    %157 = vector.broadcast %cst_48 : f32 to vector<2x384xf32>
    %158 = arith.addf %156, %157 : vector<2x384xf32>
    %159 = vector.extract_strided_slice %158 {offsets = [0, 0], sizes = [2, 128], strides = [1, 1]} : vector<2x384xf32> to vector<2x128xf32>
    %160 = vector.extract_strided_slice %158 {offsets = [0, 128], sizes = [2, 128], strides = [1, 1]} : vector<2x384xf32> to vector<2x128xf32>
    %161 = vector.extract_strided_slice %158 {offsets = [0, 256], sizes = [2, 128], strides = [1, 1]} : vector<2x384xf32> to vector<2x128xf32>
    %162 = vector.extract_strided_slice %150 {offsets = [0, 384], sizes = [2, 128], strides = [1, 1]} : vector<2x512xf32> to vector<2x128xf32>
    %163 = math.tanh %162 : vector<2x128xf32>
    %164 = arith.mulf %160, %143 : vector<2x128xf32>
    %165 = arith.mulf %159, %163 : vector<2x128xf32>
    %166 = arith.addf %164, %165 : vector<2x128xf32>
    %167 = math.tanh %166 : vector<2x128xf32>
    %168 = arith.mulf %161, %167 : vector<2x128xf32>
    %169 = arith.truncf %168 : vector<2x128xf32> to vector<2x128xbf16>
    %170 = vector.extract_strided_slice %5 {offsets = [14, 0], sizes = [2, 512], strides = [1, 1]} : vector<16x512xf32> to vector<2x512xf32>
    %c0_49 = arith.constant 0 : index
    %c0_50 = arith.constant 0 : index
    %171 = vector.load %arg2[%c0_49, %c0_50] : memref<128x512xbf16, #tpu.memory_space<vmem>>, vector<128x512xbf16>
    %cst_51 = arith.constant dense<0.000000e+00> : vector<2x512xf32>
    %172 = tpu.matmul %169, %171, %cst_51 {dimension_numbers = #tpu.dot_dimension_numbers<[1], [0], [0], [1], [0, 0, 1, 1], [], []>} : vector<2x128xbf16>, vector<128x512xbf16>, vector<2x512xf32> -> vector<2x512xf32>
    %173 = arith.addf %170, %172 : vector<2x512xf32>
    %174 = vector.extract_strided_slice %173 {offsets = [0, 0], sizes = [2, 384], strides = [1, 1]} : vector<2x512xf32> to vector<2x384xf32>
    %cst_52 = arith.constant 5.000000e-01 : f32
    %175 = vector.broadcast %cst_52 : f32 to vector<2x384xf32>
    %176 = arith.mulf %175, %174 : vector<2x384xf32>
    %177 = math.tanh %176 : vector<2x384xf32>
    %cst_53 = arith.constant 5.000000e-01 : f32
    %178 = vector.broadcast %cst_53 : f32 to vector<2x384xf32>
    %179 = arith.mulf %178, %177 : vector<2x384xf32>
    %cst_54 = arith.constant 5.000000e-01 : f32
    %180 = vector.broadcast %cst_54 : f32 to vector<2x384xf32>
    %181 = arith.addf %179, %180 : vector<2x384xf32>
    %182 = vector.extract_strided_slice %181 {offsets = [0, 0], sizes = [2, 128], strides = [1, 1]} : vector<2x384xf32> to vector<2x128xf32>
    %183 = vector.extract_strided_slice %181 {offsets = [0, 128], sizes = [2, 128], strides = [1, 1]} : vector<2x384xf32> to vector<2x128xf32>
    %184 = vector.extract_strided_slice %181 {offsets = [0, 256], sizes = [2, 128], strides = [1, 1]} : vector<2x384xf32> to vector<2x128xf32>
    %185 = vector.extract_strided_slice %173 {offsets = [0, 384], sizes = [2, 128], strides = [1, 1]} : vector<2x512xf32> to vector<2x128xf32>
    %186 = math.tanh %185 : vector<2x128xf32>
    %187 = arith.mulf %183, %166 : vector<2x128xf32>
    %188 = arith.mulf %182, %186 : vector<2x128xf32>
    %189 = arith.addf %187, %188 : vector<2x128xf32>
    %190 = math.tanh %189 : vector<2x128xf32>
    %191 = arith.mulf %184, %190 : vector<2x128xf32>
    %192 = tpu.concatenate %30, %53, %76, %99, %122, %145, %168, %191 in 0 : vector<2x128xf32>, vector<2x128xf32>, vector<2x128xf32>, vector<2x128xf32>, vector<2x128xf32>, vector<2x128xf32>, vector<2x128xf32>, vector<2x128xf32> -> vector<16x128xf32>
    %193 = arith.truncf %192 : vector<16x128xf32> to vector<16x128xbf16>
    %c0_55 = arith.constant 0 : index
    %c0_56 = arith.constant 0 : index
    %194 = vector.load %arg4[%c0_55, %c0_56] : memref<128x128xbf16, #tpu.memory_space<vmem>>, vector<128x128xbf16>
    %cst_57 = arith.constant dense<0.000000e+00> : vector<16x128xf32>
    %195 = tpu.matmul %193, %194, %cst_57 {dimension_numbers = #tpu.dot_dimension_numbers<[1], [0], [0], [1], [0, 0, 1, 1], [], []>} : vector<16x128xbf16>, vector<128x128xbf16>, vector<16x128xf32> -> vector<16x128xf32>
    %c0_58 = arith.constant 0 : index
    %c0_59 = arith.constant 0 : index
    %196 = vector.load %arg5[%c0_58, %c0_59] : memref<1x128xf32, #tpu.memory_space<vmem>>, vector<1x128xf32>
    %197 = vector.broadcast %196 : vector<1x128xf32> to vector<16x128xf32>
    %198 = arith.addf %195, %197 : vector<16x128xf32>
    %c0_60 = arith.constant 0 : index
    %c0_61 = arith.constant 0 : index
    %199 = vector.load %arg6[%c0_60, %c0_61] : memref<16x128xf32, #tpu.memory_space<vmem>>, vector<16x128xf32>
    tpu.vector_store %arg6[%c0_60, %c0_61], %198 {strides = array<i32>} : memref<16x128xf32, #tpu.memory_space<vmem>>, vector<16x128xf32>,
    return
  }
}

</mosaic_0001>

<llo_original>
// kernel: classifier_forward.1
$region0: #{classifier_forward.1}
  #allocation0 [shape = 'u32[]', space=smem, size = 0x4, offset = 0x4, fixed_abs, tag = 'smem constant byte address 0x4 - core index']
  #allocation1 [shape = 'u32[144,128]{1,0:T(1,128)}', space=vmem, size = 0x12000, scoped, tag = 'internal scratch']
  %s0 = inlined_call_operand.vmem [shape: bf16[16,256], index: 0, kind: input, shape index: {}]
  %s1 = inlined_call_operand.vmem [shape: bf16[256,512], index: 1, kind: input, shape index: {}]
  %s2 = inlined_call_operand.vmem [shape: bf16[128,512], index: 2, kind: input, shape index: {}]
  %s3 = inlined_call_operand.vmem [shape: f32[1,512], index: 3, kind: input, shape index: {}]
  %s4 = inlined_call_operand.vmem [shape: bf16[128,128], index: 4, kind: input, shape index: {}]
  %s5 = inlined_call_operand.vmem [shape: f32[1,128], index: 5, kind: input, shape index: {}]
  %s6 = inlined_call_operand.vmem [shape: f32[16,128], index: 6, kind: output, shape index: {}]
  %s7 = sld [smem:[#allocation0]]
  $region34: #{classifier_forward.1} parent=0
    _
  %s9 = ssub.s32 1, %s7
  %s10 = scalar_select 0, %s9, %s7
  // Predicated region
  $region2: #{classifier_forward.1} parent=0 // pred_check
    _
  $region3: #{classifier_forward.1} parent=0 // pred_check_branch
    %12 = sbr.rel (0) target = $region5
  $region4: #{classifier_forward.1} parent=0 // pred_region
    _
  $region5: #{classifier_forward.1} parent=0 // pred_fallthru
    _
  // Predicated region
  $region6: #{classifier_forward.1} parent=0 // pred_check
    _
  $region7: #{classifier_forward.1} parent=0 // pred_check_branch
    %14 = sbr.rel (0) target = $region9
  $region8: #{classifier_forward.1} parent=0 // pred_region
    _
  $region9: #{classifier_forward.1} parent=0 // pred_fallthru
    _
  // Predicated region
  $region10: #{classifier_forward.1} parent=0 // pred_check
    _
  $region11: #{classifier_forward.1} parent=0 // pred_check_branch
    %16 = sbr.rel (0) target = $region13
  $region12: #{classifier_forward.1} parent=0 // pred_region
    _
  $region13: #{classifier_forward.1} parent=0 // pred_fallthru
    _
  // Predicated region
  $region14: #{classifier_forward.1} parent=0 // pred_check
    _
  $region15: #{classifier_forward.1} parent=0 // pred_check_branch
    %18 = sbr.rel (0) target = $region17
  $region16: #{classifier_forward.1} parent=0 // pred_region
    _
  $region17: #{classifier_forward.1} parent=0 // pred_fallthru
    _
  // Predicated region
  $region18: #{classifier_forward.1} parent=0 // pred_check
    _
  $region19: #{classifier_forward.1} parent=0 // pred_check_branch
    %20 = sbr.rel (0) target = $region21
  $region20: #{classifier_forward.1} parent=0 // pred_region
    _
  $region21: #{classifier_forward.1} parent=0 // pred_fallthru
    _
  // Predicated region
  $region22: #{classifier_forward.1} parent=0 // pred_check
    _
  $region23: #{classifier_forward.1} parent=0 // pred_check_branch
    %22 = sbr.rel (0) target = $region25
  $region24: #{classifier_forward.1} parent=0 // pred_region
    _
  $region25: #{classifier_forward.1} parent=0 // pred_fallthru
    _
  %v24 = vld [vmem:[%s0] sm:$0xff]
  %v25 = vld [vmem:[%s0 + $0x8] sm:$0xff]
  %v26 = vld [vmem:[%s1] sm:$0xff]
  %v27 = vld [vmem:[%s1 + $0x8] sm:$0xff]
  %v28 = vld [vmem:[%s1 + $0x10] sm:$0xff]
  %v29 = vld [vmem:[%s1 + $0x18] sm:$0xff]
  %v30 = vld [vmem:[%s1 + $0x20] sm:$0xff]
  %v31 = vld [vmem:[%s1 + $0x28] sm:$0xff]
  %v32 = vld [vmem:[%s1 + $0x30] sm:$0xff]
  %v33 = vld [vmem:[%s1 + $0x38] sm:$0xff]
  %v34 = vld [vmem:[%s1 + $0x40] sm:$0xff]
  %v35 = vld [vmem:[%s1 + $0x48] sm:$0xff]
  %v36 = vld [vmem:[%s1 + $0x50] sm:$0xff]
  %v37 = vld [vmem:[%s1 + $0x58] sm:$0xff]
  %v38 = vld [vmem:[%s1 + $0x60] sm:$0xff]
  %v39 = vld [vmem:[%s1 + $0x68] sm:$0xff]
  %v40 = vld [vmem:[%s1 + $0x70] sm:$0xff]
  %v41 = vld [vmem:[%s1 + $0x78] sm:$0xff]
  %v42 = vld [vmem:[%s1 + $0x80] sm:$0xff]
  %v43 = vld [vmem:[%s1 + $0x88] sm:$0xff]
  %v44 = vld [vmem:[%s1 + $0x90] sm:$0xff]
  %v45 = vld [vmem:[%s1 + $0x98] sm:$0xff]
  %v46 = vld [vmem:[%s1 + $0xa0] sm:$0xff]
  %v47 = vld [vmem:[%s1 + $0xa8] sm:$0xff]
  %v48 = vld [vmem:[%s1 + $0xb0] sm:$0xff]
  %v49 = vld [vmem:[%s1 + $0xb8] sm:$0xff]
  %v50 = vld [vmem:[%s1 + $0xc0] sm:$0xff]
  %v51 = vld [vmem:[%s1 + $0xc8] sm:$0xff]
  %v52 = vld [vmem:[%s1 + $0xd0] sm:$0xff]
  %v53 = vld [vmem:[%s1 + $0xd8] sm:$0xff]
  %v54 = vld [vmem:[%s1 + $0xe0] sm:$0xff]
  %v55 = vld [vmem:[%s1 + $0xe8] sm:$0xff]
  %v56 = vld [vmem:[%s1 + $0xf0] sm:$0xff]
  %v57 = vld [vmem:[%s1 + $0xf8] sm:$0xff]
  %v58 = vld [vmem:[%s1 + $0x100] sm:$0xff]
  %v59 = vld [vmem:[%s1 + $0x108] sm:$0xff]
  %v60 = vld [vmem:[%s1 + $0x110] sm:$0xff]
  %v61 = vld [vmem:[%s1 + $0x118] sm:$0xff]
  %v62 = vld [vmem:[%s1 + $0x120] sm:$0xff]
  %v63 = vld [vmem:[%s1 + $0x128] sm:$0xff]
  %v64 = vld [vmem:[%s1 + $0x130] sm:$0xff]
  %v65 = vld [vmem:[%s1 + $0x138] sm:$0xff]
  %v66 = vld [vmem:[%s1 + $0x140] sm:$0xff]
  %v67 = vld [vmem:[%s1 + $0x148] sm:$0xff]
  %v68 = vld [vmem:[%s1 + $0x150] sm:$0xff]
  %v69 = vld [vmem:[%s1 + $0x158] sm:$0xff]
  %v70 = vld [vmem:[%s1 + $0x160] sm:$0xff]
  %v71 = vld [vmem:[%s1 + $0x168] sm:$0xff]
  %v72 = vld [vmem:[%s1 + $0x170] sm:$0xff]
  %v73 = vld [vmem:[%s1 + $0x178] sm:$0xff]
  %v74 = vld [vmem:[%s1 + $0x180] sm:$0xff]
  %v75 = vld [vmem:[%s1 + $0x188] sm:$0xff]
  %v76 = vld [vmem:[%s1 + $0x190] sm:$0xff]
  %v77 = vld [vmem:[%s1 + $0x198] sm:$0xff]
  %v78 = vld [vmem:[%s1 + $0x1a0] sm:$0xff]
  %v79 = vld [vmem:[%s1 + $0x1a8] sm:$0xff]
  %v80 = vld [vmem:[%s1 + $0x1b0] sm:$0xff]
  %v81 = vld [vmem:[%s1 + $0x1b8] sm:$0xff]
  %v82 = vld [vmem:[%s1 + $0x1c0] sm:$0xff]
  %v83 = vld [vmem:[%s1 + $0x1c8] sm:$0xff]
  %v84 = vld [vmem:[%s1 + $0x1d0] sm:$0xff]
  %v85 = vld [vmem:[%s1 + $0x1d8] sm:$0xff]
  %v86 = vld [vmem:[%s1 + $0x1e0] sm:$0xff]
  %v87 = vld [vmem:[%s1 + $0x1e8] sm:$0xff]
  %v88 = vld [vmem:[%s1 + $0x1f0] sm:$0xff]
  %v89 = vld [vmem:[%s1 + $0x1f8] sm:$0xff]
  %v90 = vld [vmem:[%s3] sm:$0xf]
  %v92 = vlaneseq
  %v93 = vshrl.u32 %v92, 7
  %v94 = vsub.s32 0, %v93
  %v95 = vrot.slane %v90, %v94
  %v96 = vlaneseq
  %v97 = vshrl.u32 %v96, 7
  %v98 = vsub.s32 1, %v97
  %v99 = vrot.slane %v90, %v98
  %v100 = vlaneseq
  %v101 = vshrl.u32 %v100, 7
  %v102 = vsub.s32 2, %v101
  %v103 = vrot.slane %v90, %v102
  %v104 = vlaneseq
  %v105 = vshrl.u32 %v104, 7
  %v106 = vsub.s32 3, %v105
  %v107 = vrot.slane %v90, %v106
  %v114 = vunpack.c.l.b16 %v24
  %v115 = vunpack.c.h.b16 %v24
  %v116 = vunpack.c.l.b16 %v25
  %v117 = vunpack.c.h.b16 %v25
  %v118 = vpack.c.b16 %v116, %v114
  %v119 = vpack.c.b16 %v117, %v115
  %v186 = vunpack.c.l.b16 %v26
  %v187 = vunpack.c.h.b16 %v26
  %v188 = vunpack.c.l.b16 %v27
  %v189 = vunpack.c.h.b16 %v27
  %v190 = vunpack.c.l.b16 %v28
  %v191 = vunpack.c.h.b16 %v28
  %v192 = vunpack.c.l.b16 %v29
  %v193 = vunpack.c.h.b16 %v29
  %v194 = vunpack.c.l.b16 %v30
  %v195 = vunpack.c.h.b16 %v30
  %v196 = vunpack.c.l.b16 %v31
  %v197 = vunpack.c.h.b16 %v31
  %v198 = vunpack.c.l.b16 %v32
  %v199 = vunpack.c.h.b16 %v32
  %v200 = vunpack.c.l.b16 %v33
  %v201 = vunpack.c.h.b16 %v33
  %v202 = vunpack.c.l.b16 %v34
  %v203 = vunpack.c.h.b16 %v34
  %v204 = vunpack.c.l.b16 %v35
  %v205 = vunpack.c.h.b16 %v35
  %v206 = vunpack.c.l.b16 %v36
  %v207 = vunpack.c.h.b16 %v36
  %v208 = vunpack.c.l.b16 %v37
  %v209 = vunpack.c.h.b16 %v37
  %v210 = vunpack.c.l.b16 %v38
  %v211 = vunpack.c.h.b16 %v38
  %v212 = vunpack.c.l.b16 %v39
  %v213 = vunpack.c.h.b16 %v39
  %v214 = vunpack.c.l.b16 %v40
  %v215 = vunpack.c.h.b16 %v40
  %v216 = vunpack.c.l.b16 %v41
  %v217 = vunpack.c.h.b16 %v41
  %v218 = vunpack.c.l.b16 %v42
  %v219 = vunpack.c.h.b16 %v42
  %v220 = vunpack.c.l.b16 %v43
  %v221 = vunpack.c.h.b16 %v43
  %v222 = vunpack.c.l.b16 %v44
  %v223 = vunpack.c.h.b16 %v44
  %v224 = vunpack.c.l.b16 %v45
  %v225 = vunpack.c.h.b16 %v45
  %v226 = vunpack.c.l.b16 %v46
  %v227 = vunpack.c.h.b16 %v46
  %v228 = vunpack.c.l.b16 %v47
  %v229 = vunpack.c.h.b16 %v47
  %v230 = vunpack.c.l.b16 %v48
  %v231 = vunpack.c.h.b16 %v48
  %v232 = vunpack.c.l.b16 %v49
  %v233 = vunpack.c.h.b16 %v49
  %v234 = vunpack.c.l.b16 %v50
  %v235 = vunpack.c.h.b16 %v50
  %v236 = vunpack.c.l.b16 %v51
  %v237 = vunpack.c.h.b16 %v51
  %v238 = vunpack.c.l.b16 %v52
  %v239 = vunpack.c.h.b16 %v52
  %v240 = vunpack.c.l.b16 %v53
  %v241 = vunpack.c.h.b16 %v53
  %v242 = vunpack.c.l.b16 %v54
  %v243 = vunpack.c.h.b16 %v54
  %v244 = vunpack.c.l.b16 %v55
  %v245 = vunpack.c.h.b16 %v55
  %v246 = vunpack.c.l.b16 %v56
  %v247 = vunpack.c.h.b16 %v56
  %v248 = vunpack.c.l.b16 %v57
  %v249 = vunpack.c.h.b16 %v57
  %v250 = vunpack.c.l.b16 %v58
  %v251 = vunpack.c.h.b16 %v58
  %v252 = vunpack.c.l.b16 %v59
  %v253 = vunpack.c.h.b16 %v59
  %v254 = vunpack.c.l.b16 %v60
  %v255 = vunpack.c.h.b16 %v60
  %v256 = vunpack.c.l.b16 %v61
  %v257 = vunpack.c.h.b16 %v61
  %v258 = vunpack.c.l.b16 %v62
  %v259 = vunpack.c.h.b16 %v62
  %v260 = vunpack.c.l.b16 %v63
  %v261 = vunpack.c.h.b16 %v63
  %v262 = vunpack.c.l.b16 %v64
  %v263 = vunpack.c.h.b16 %v64
  %v264 = vunpack.c.l.b16 %v65
  %v265 = vunpack.c.h.b16 %v65
  %v266 = vunpack.c.l.b16 %v66
  %v267 = vunpack.c.h.b16 %v66
  %v268 = vunpack.c.l.b16 %v67
  %v269 = vunpack.c.h.b16 %v67
  %v270 = vunpack.c.l.b16 %v68
  %v271 = vunpack.c.h.b16 %v68
  %v272 = vunpack.c.l.b16 %v69
  %v273 = vunpack.c.h.b16 %v69
  %v274 = vunpack.c.l.b16 %v70
  %v275 = vunpack.c.h.b16 %v70
  %v276 = vunpack.c.l.b16 %v71
  %v277 = vunpack.c.h.b16 %v71
  %v278 = vunpack.c.l.b16 %v72
  %v279 = vunpack.c.h.b16 %v72
  %v280 = vunpack.c.l.b16 %v73
  %v281 = vunpack.c.h.b16 %v73
  %v282 = vunpack.c.l.b16 %v74
  %v283 = vunpack.c.h.b16 %v74
  %v284 = vunpack.c.l.b16 %v75
  %v285 = vunpack.c.h.b16 %v75
  %v286 = vunpack.c.l.b16 %v76
  %v287 = vunpack.c.h.b16 %v76
  %v288 = vunpack.c.l.b16 %v77
  %v289 = vunpack.c.h.b16 %v77
  %v290 = vunpack.c.l.b16 %v78
  %v291 = vunpack.c.h.b16 %v78
  %v292 = vunpack.c.l.b16 %v79
  %v293 = vunpack.c.h.b16 %v79
  %v294 = vunpack.c.l.b16 %v80
  %v295 = vunpack.c.h.b16 %v80
  %v296 = vunpack.c.l.b16 %v81
  %v297 = vunpack.c.h.b16 %v81
  %v298 = vunpack.c.l.b16 %v82
  %v299 = vunpack.c.h.b16 %v82
  %v300 = vunpack.c.l.b16 %v83
  %v301 = vunpack.c.h.b16 %v83
  %v302 = vunpack.c.l.b16 %v84
  %v303 = vunpack.c.h.b16 %v84
  %v304 = vunpack.c.l.b16 %v85
  %v305 = vunpack.c.h.b16 %v85
  %v306 = vunpack.c.l.b16 %v86
  %v307 = vunpack.c.h.b16 %v86
  %v308 = vunpack.c.l.b16 %v87
  %v309 = vunpack.c.h.b16 %v87
  %v310 = vunpack.c.l.b16 %v88
  %v311 = vunpack.c.h.b16 %v88
  %v312 = vunpack.c.l.b16 %v89
  %v313 = vunpack.c.h.b16 %v89
  %v314 = vpack.c.b16 %v190, %v186
  %v315 = vpack.c.b16 %v191, %v187
  %v316 = vpack.c.b16 %v192, %v188
  %v317 = vpack.c.b16 %v193, %v189
  %v318 = vpack.c.b16 %v198, %v194
  %v319 = vpack.c.b16 %v199, %v195
  %v320 = vpack.c.b16 %v200, %v196
  %v321 = vpack.c.b16 %v201, %v197
  %v322 = vpack.c.b16 %v206, %v202
  %v323 = vpack.c.b16 %v207, %v203
  %v324 = vpack.c.b16 %v208, %v204
  %v325 = vpack.c.b16 %v209, %v205
  %v326 = vpack.c.b16 %v214, %v210
  %v327 = vpack.c.b16 %v215, %v211
  %v328 = vpack.c.b16 %v216, %v212
  %v329 = vpack.c.b16 %v217, %v213
  %v330 = vpack.c.b16 %v222, %v218
  %v331 = vpack.c.b16 %v223, %v219
  %v332 = vpack.c.b16 %v224, %v220
  %v333 = vpack.c.b16 %v225, %v221
  %v334 = vpack.c.b16 %v230, %v226
  %v335 = vpack.c.b16 %v231, %v227
  %v336 = vpack.c.b16 %v232, %v228
  %v337 = vpack.c.b16 %v233, %v229
  %v338 = vpack.c.b16 %v238, %v234
  %v339 = vpack.c.b16 %v239, %v235
  %v340 = vpack.c.b16 %v240, %v236
  %v341 = vpack.c.b16 %v241, %v237
  %v342 = vpack.c.b16 %v246, %v242
  %v343 = vpack.c.b16 %v247, %v243
  %v344 = vpack.c.b16 %v248, %v244
  %v345 = vpack.c.b16 %v249, %v245
  %v346 = vpack.c.b16 %v254, %v250
  %v347 = vpack.c.b16 %v255, %v251
  %v348 = vpack.c.b16 %v256, %v252
  %v349 = vpack.c.b16 %v257, %v253
  %v350 = vpack.c.b16 %v262, %v258
  %v351 = vpack.c.b16 %v263, %v259
  %v352 = vpack.c.b16 %v264, %v260
  %v353 = vpack.c.b16 %v265, %v261
  %v354 = vpack.c.b16 %v270, %v266
  %v355 = vpack.c.b16 %v271, %v267
  %v356 = vpack.c.b16 %v272, %v268
  %v357 = vpack.c.b16 %v273, %v269
  %v358 = vpack.c.b16 %v278, %v274
  %v359 = vpack.c.b16 %v279, %v275
  %v360 = vpack.c.b16 %v280, %v276
  %v361 = vpack.c.b16 %v281, %v277
  %v362 = vpack.c.b16 %v286, %v282
  %v363 = vpack.c.b16 %v287, %v283
  %v364 = vpack.c.b16 %v288, %v284
  %v365 = vpack.c.b16 %v289, %v285
  %v366 = vpack.c.b16 %v294, %v290
  %v367 = vpack.c.b16 %v295, %v291
  %v368 = vpack.c.b16 %v296, %v292
  %v369 = vpack.c.b16 %v297, %v293
  %v370 = vpack.c.b16 %v302, %v298
  %v371 = vpack.c.b16 %v303, %v299
  %v372 = vpack.c.b16 %v304, %v300
  %v373 = vpack.c.b16 %v305, %v301
  %v374 = vpack.c.b16 %v310, %v306
  %v375 = vpack.c.b16 %v311, %v307
  %v376 = vpack.c.b16 %v312, %v308
  %v377 = vpack.c.b16 %v313, %v309
  %442 = vmatprep.subr.bf16.mxu0 %v315
  %443 = vmatpush1.bf16.msra.mxu0 %v314
  %444 = vmatprep.subr.bf16.mxu0 %v319
  %445 = vmatpush1.bf16.msra.mxu0 %v318
  %446 = vmatprep.subr.bf16.mxu0 %v323
  %447 = vmatpush1.bf16.msra.mxu0 %v322
  %448 = vmatprep.subr.bf16.mxu0 %v327
  %449 = vmatpush1.bf16.msra.mxu0 %v326
  %450 = vmatprep.subr.bf16.mxu0 %v331
  %451 = vmatpush1.bf16.msra.mxu0 %v330
  %452 = vmatprep.subr.bf16.mxu0 %v335
  %453 = vmatpush1.bf16.msra.mxu0 %v334
  %454 = vmatprep.subr.bf16.mxu0 %v339
  %455 = vmatpush1.bf16.msra.mxu0 %v338
  %456 = vmatprep.subr.bf16.mxu0 %v343
  %457 = vmatpush1.bf16.msra.mxu0 %v342
  %458 = vmatprep.subr.bf16.mxu0 %v347
  %459 = vmatpush1.bf16.msra.mxu0 %v346
  %460 = vmatprep.subr.bf16.mxu0 %v351
  %461 = vmatpush1.bf16.msra.mxu0 %v350
  %462 = vmatprep.subr.bf16.mxu0 %v355
  %463 = vmatpush1.bf16.msra.mxu0 %v354
  %464 = vmatprep.subr.bf16.mxu0 %v359
  %465 = vmatpush1.bf16.msra.mxu0 %v358
  %466 = vmatprep.subr.bf16.mxu0 %v363
  %467 = vmatpush1.bf16.msra.mxu0 %v362
  %468 = vmatprep.subr.bf16.mxu0 %v367
  %469 = vmatpush1.bf16.msra.mxu0 %v366
  %470 = vmatprep.subr.bf16.mxu0 %v371
  %471 = vmatpush1.bf16.msra.mxu0 %v370
  %472 = vmatprep.subr.bf16.mxu0 %v375
  %473 = vmatpush1.bf16.msra.mxu0 %v374
  %474 = vmatprep.mubr.bf16.mxu0 %v119
  %475 = vmatmul.mubr.bf16.gmra.mrb[0].mxu0 %v118
  %v476 = vpop.f32.mrb[0].mxu0
  %v477 = vadd.f32 %v95, %v476
  %v478 = vpop.f32.mrb[0].mxu0
  %v479 = vadd.f32 %v99, %v478
  %v480 = vpop.f32.mrb[0].mxu0
  %v481 = vadd.f32 %v95, %v480
  %v482 = vpop.f32.mrb[0].mxu0
  %v483 = vadd.f32 %v99, %v482
  %484 = vdwg.mxu0
  %485 = vmatprep.subr.bf16.mxu0 %v317
  %486 = vmatpush1.bf16.msra.mxu0 %v316
  %487 = vmatprep.subr.bf16.mxu0 %v321
  %488 = vmatpush1.bf16.msra.mxu0 %v320
  %489 = vmatprep.subr.bf16.mxu0 %v325
  %490 = vmatpush1.bf16.msra.mxu0 %v324
  %491 = vmatprep.subr.bf16.mxu0 %v329
  %492 = vmatpush1.bf16.msra.mxu0 %v328
  %493 = vmatprep.subr.bf16.mxu0 %v333
  %494 = vmatpush1.bf16.msra.mxu0 %v332
  %495 = vmatprep.subr.bf16.mxu0 %v337
  %496 = vmatpush1.bf16.msra.mxu0 %v336
  %497 = vmatprep.subr.bf16.mxu0 %v341
  %498 = vmatpush1.bf16.msra.mxu0 %v340
  %499 = vmatprep.subr.bf16.mxu0 %v345
  %500 = vmatpush1.bf16.msra.mxu0 %v344
  %501 = vmatprep.subr.bf16.mxu0 %v349
  %502 = vmatpush1.bf16.msra.mxu0 %v348
  %503 = vmatprep.subr.bf16.mxu0 %v353
  %504 = vmatpush1.bf16.msra.mxu0 %v352
  %505 = vmatprep.subr.bf16.mxu0 %v357
  %506 = vmatpush1.bf16.msra.mxu0 %v356
  %507 = vmatprep.subr.bf16.mxu0 %v361
  %508 = vmatpush1.bf16.msra.mxu0 %v360
  %509 = vmatprep.subr.bf16.mxu0 %v365
  %510 = vmatpush1.bf16.msra.mxu0 %v364
  %511 = vmatprep.subr.bf16.mxu0 %v369
  %512 = vmatpush1.bf16.msra.mxu0 %v368
  %513 = vmatprep.subr.bf16.mxu0 %v373
  %514 = vmatpush1.bf16.msra.mxu0 %v372
  %515 = vmatprep.subr.bf16.mxu0 %v377
  %516 = vmatpush1.bf16.msra.mxu0 %v376
  %517 = vmatprep.mubr.bf16.mxu0 %v119
  %518 = vmatmul.mubr.bf16.gmra.mrb[0].mxu0 %v118
  %v519 = vpop.f32.mrb[0].mxu0
  %v520 = vadd.f32 %v103, %v519
  %v521 = vpop.f32.mrb[0].mxu0
  %v522 = vadd.f32 %v107, %v521
  %v523 = vpop.f32.mrb[0].mxu0
  %v524 = vadd.f32 %v103, %v523
  %v525 = vpop.f32.mrb[0].mxu0
  %v526 = vadd.f32 %v107, %v525
  %527 = vdwg.mxu0
  %v528 = vld [vmem:[%s2] sm:$0xff]
  %v529 = vld [vmem:[%s2 + $0x8] sm:$0xff]
  %v530 = vld [vmem:[%s2 + $0x10] sm:$0xff]
  %v531 = vld [vmem:[%s2 + $0x18] sm:$0xff]
  %v532 = vld [vmem:[%s2 + $0x20] sm:$0xff]
  %v533 = vld [vmem:[%s2 + $0x28] sm:$0xff]
  %v534 = vld [vmem:[%s2 + $0x30] sm:$0xff]
  %v535 = vld [vmem:[%s2 + $0x38] sm:$0xff]
  %v536 = vld [vmem:[%s2 + $0x40] sm:$0xff]
  %v537 = vld [vmem:[%s2 + $0x48] sm:$0xff]
  %v538 = vld [vmem:[%s2 + $0x50] sm:$0xff]
  %v539 = vld [vmem:[%s2 + $0x58] sm:$0xff]
  %v540 = vld [vmem:[%s2 + $0x60] sm:$0xff]
  %v541 = vld [vmem:[%s2 + $0x68] sm:$0xff]
  %v542 = vld [vmem:[%s2 + $0x70] sm:$0xff]
  %v543 = vld [vmem:[%s2 + $0x78] sm:$0xff]
  %v544 = vld [vmem:[%s2 + $0x80] sm:$0xff]
  %v545 = vld [vmem:[%s2 + $0x88] sm:$0xff]
  %v546 = vld [vmem:[%s2 + $0x90] sm:$0xff]
  %v547 = vld [vmem:[%s2 + $0x98] sm:$0xff]
  %v548 = vld [vmem:[%s2 + $0xa0] sm:$0xff]
  %v549 = vld [vmem:[%s2 + $0xa8] sm:$0xff]
  %v550 = vld [vmem:[%s2 + $0xb0] sm:$0xff]
  %v551 = vld [vmem:[%s2 + $0xb8] sm:$0xff]
  %v552 = vld [vmem:[%s2 + $0xc0] sm:$0xff]
  %v553 = vld [vmem:[%s2 + $0xc8] sm:$0xff]
  %v554 = vld [vmem:[%s2 + $0xd0] sm:$0xff]
  %v555 = vld [vmem:[%s2 + $0xd8] sm:$0xff]
  %v556 = vld [vmem:[%s2 + $0xe0] sm:$0xff]
  %v557 = vld [vmem:[%s2 + $0xe8] sm:$0xff]
  %v558 = vld [vmem:[%s2 + $0xf0] sm:$0xff]
  %v559 = vld [vmem:[%s2 + $0xf8] sm:$0xff]
  %v592 = vunpack.c.l.b16 %v528
  %v593 = vunpack.c.h.b16 %v528
  %v594 = vunpack.c.l.b16 %v529
  %v595 = vunpack.c.h.b16 %v529
  %v596 = vunpack.c.l.b16 %v530
  %v597 = vunpack.c.h.b16 %v530
  %v598 = vunpack.c.l.b16 %v531
  %v599 = vunpack.c.h.b16 %v531
  %v600 = vunpack.c.l.b16 %v532
  %v601 = vunpack.c.h.b16 %v532
  %v602 = vunpack.c.l.b16 %v533
  %v603 = vunpack.c.h.b16 %v533
  %v604 = vunpack.c.l.b16 %v534
  %v605 = vunpack.c.h.b16 %v534
  %v606 = vunpack.c.l.b16 %v535
  %v607 = vunpack.c.h.b16 %v535
  %v608 = vunpack.c.l.b16 %v536
  %v609 = vunpack.c.h.b16 %v536
  %v610 = vunpack.c.l.b16 %v537
  %v611 = vunpack.c.h.b16 %v537
  %v612 = vunpack.c.l.b16 %v538
  %v613 = vunpack.c.h.b16 %v538
  %v614 = vunpack.c.l.b16 %v539
  %v615 = vunpack.c.h.b16 %v539
  %v616 = vunpack.c.l.b16 %v540
  %v617 = vunpack.c.h.b16 %v540
  %v618 = vunpack.c.l.b16 %v541
  %v619 = vunpack.c.h.b16 %v541
  %v620 = vunpack.c.l.b16 %v542
  %v621 = vunpack.c.h.b16 %v542
  %v622 = vunpack.c.l.b16 %v543
  %v623 = vunpack.c.h.b16 %v543
  %v624 = vunpack.c.l.b16 %v544
  %v625 = vunpack.c.h.b16 %v544
  %v626 = vunpack.c.l.b16 %v545
  %v627 = vunpack.c.h.b16 %v545
  %v628 = vunpack.c.l.b16 %v546
  %v629 = vunpack.c.h.b16 %v546
  %v630 = vunpack.c.l.b16 %v547
  %v631 = vunpack.c.h.b16 %v547
  %v632 = vunpack.c.l.b16 %v548
  %v633 = vunpack.c.h.b16 %v548
  %v634 = vunpack.c.l.b16 %v549
  %v635 = vunpack.c.h.b16 %v549
  %v636 = vunpack.c.l.b16 %v550
  %v637 = vunpack.c.h.b16 %v550
  %v638 = vunpack.c.l.b16 %v551
  %v639 = vunpack.c.h.b16 %v551
  %v640 = vunpack.c.l.b16 %v552
  %v641 = vunpack.c.h.b16 %v552
  %v642 = vunpack.c.l.b16 %v553
  %v643 = vunpack.c.h.b16 %v553
  %v644 = vunpack.c.l.b16 %v554
  %v645 = vunpack.c.h.b16 %v554
  %v646 = vunpack.c.l.b16 %v555
  %v647 = vunpack.c.h.b16 %v555
  %v648 = vunpack.c.l.b16 %v556
  %v649 = vunpack.c.h.b16 %v556
  %v650 = vunpack.c.l.b16 %v557
  %v651 = vunpack.c.h.b16 %v557
  %v652 = vunpack.c.l.b16 %v558
  %v653 = vunpack.c.h.b16 %v558
  %v654 = vunpack.c.l.b16 %v559
  %v655 = vunpack.c.h.b16 %v559
  %v656 = vpack.c.b16 %v596, %v592
  %v657 = vpack.c.b16 %v597, %v593
  %v658 = vpack.c.b16 %v598, %v594
  %v659 = vpack.c.b16 %v599, %v595
  %v660 = vpack.c.b16 %v604, %v600
  %v661 = vpack.c.b16 %v605, %v601
  %v662 = vpack.c.b16 %v606, %v602
  %v663 = vpack.c.b16 %v607, %v603
  %v664 = vpack.c.b16 %v612, %v608
  %v665 = vpack.c.b16 %v613, %v609
  %v666 = vpack.c.b16 %v614, %v610
  %v667 = vpack.c.b16 %v615, %v611
  %v668 = vpack.c.b16 %v620, %v616
  %v669 = vpack.c.b16 %v621, %v617
  %v670 = vpack.c.b16 %v622, %v618
  %v671 = vpack.c.b16 %v623, %v619
  %v672 = vpack.c.b16 %v628, %v624
  %v673 = vpack.c.b16 %v629, %v625
  %v674 = vpack.c.b16 %v630, %v626
  %v675 = vpack.c.b16 %v631, %v627
  %v676 = vpack.c.b16 %v636, %v632
  %v677 = vpack.c.b16 %v637, %v633
  %v678 = vpack.c.b16 %v638, %v634
  %v679 = vpack.c.b16 %v639, %v635
  %v680 = vpack.c.b16 %v644, %v640
  %v681 = vpack.c.b16 %v645, %v641
  %v682 = vpack.c.b16 %v646, %v642
  %v683 = vpack.c.b16 %v647, %v643
  %v684 = vpack.c.b16 %v652, %v648
  %v685 = vpack.c.b16 %v653, %v649
  %v686 = vpack.c.b16 %v654, %v650
  %v687 = vpack.c.b16 %v655, %v651
  %720 = vmatprep.subr.bf16.mxu0 %v657
  %721 = vmatpush1.bf16.msra.mxu0 %v656
  %722 = vmatprep.subr.bf16.mxu0 %v661
  %723 = vmatpush1.bf16.msra.mxu0 %v660
  %724 = vmatprep.subr.bf16.mxu0 %v665
  %725 = vmatpush1.bf16.msra.mxu0 %v664
  %726 = vmatprep.subr.bf16.mxu0 %v669
  %727 = vmatpush1.bf16.msra.mxu0 %v668
  %728 = vmatprep.subr.bf16.mxu0 %v673
  %729 = vmatpush1.bf16.msra.mxu0 %v672
  %730 = vmatprep.subr.bf16.mxu0 %v677
  %731 = vmatpush1.bf16.msra.mxu0 %v676
  %732 = vmatprep.subr.bf16.mxu0 %v681
  %733 = vmatpush1.bf16.msra.mxu0 %v680
  %734 = vmatprep.subr.bf16.mxu0 %v685
  %735 = vmatpush1.bf16.msra.mxu0 %v684
  %736 = vmatprep.subr.bf16.mxu0 0
  %737 = vmatpush1.bf16.msra.mxu0 0
  %738 = vmatprep.subr.bf16.mxu0 0
  %739 = vmatpush1.bf16.msra.mxu0 0
  %740 = vmatprep.subr.bf16.mxu0 0
  %741 = vmatpush1.bf16.msra.mxu0 0
  %742 = vmatprep.subr.bf16.mxu0 0
  %743 = vmatpush1.bf16.msra.mxu0 0
  %744 = vmatprep.subr.bf16.mxu0 0
  %745 = vmatpush1.bf16.msra.mxu0 0
  %746 = vmatprep.subr.bf16.mxu0 0
  %747 = vmatpush1.bf16.msra.mxu0 0
  %748 = vmatprep.subr.bf16.mxu0 0
  %749 = vmatpush1.bf16.msra.mxu0 0
  %750 = vmatprep.subr.bf16.mxu0 0
  %751 = vmatpush1.bf16.msra.mxu0 0
  %752 = vmatprep.mubr.bf16.mxu0 0
  %753 = vmatmul.mubr.bf16.gmra.mrb[0].mxu0 0
  %v754 = vpop.f32.mrb[0].mxu0
  %v755 = vadd.f32 0.0, %v754
  %v756 = vpop.f32.mrb[0].mxu0
  %v757 = vadd.f32 0.0, %v756
  %v758 = vpop.f32.mrb[0].mxu0
  %v759 = vpop.f32.mrb[0].mxu0
  %760 = vdwg.mxu0
  %761 = vmatprep.subr.bf16.mxu0 %v659
  %762 = vmatpush1.bf16.msra.mxu0 %v658
  %763 = vmatprep.subr.bf16.mxu0 %v663
  %764 = vmatpush1.bf16.msra.mxu0 %v662
  %765 = vmatprep.subr.bf16.mxu0 %v667
  %766 = vmatpush1.bf16.msra.mxu0 %v666
  %767 = vmatprep.subr.bf16.mxu0 %v671
  %768 = vmatpush1.bf16.msra.mxu0 %v670
  %769 = vmatprep.subr.bf16.mxu0 %v675
  %770 = vmatpush1.bf16.msra.mxu0 %v674
  %771 = vmatprep.subr.bf16.mxu0 %v679
  %772 = vmatpush1.bf16.msra.mxu0 %v678
  %773 = vmatprep.subr.bf16.mxu0 %v683
  %774 = vmatpush1.bf16.msra.mxu0 %v682
  %775 = vmatprep.subr.bf16.mxu0 %v687
  %776 = vmatpush1.bf16.msra.mxu0 %v686
  %777 = vmatprep.subr.bf16.mxu0 0
  %778 = vmatpush1.bf16.msra.mxu0 0
  %779 = vmatprep.subr.bf16.mxu0 0
  %780 = vmatpush1.bf16.msra.mxu0 0
  %781 = vmatprep.subr.bf16.mxu0 0
  %782 = vmatpush1.bf16.msra.mxu0 0
  %783 = vmatprep.subr.bf16.mxu0 0
  %784 = vmatpush1.bf16.msra.mxu0 0
  %785 = vmatprep.subr.bf16.mxu0 0
  %786 = vmatpush1.bf16.msra.mxu0 0
  %787 = vmatprep.subr.bf16.mxu0 0
  %788 = vmatpush1.bf16.msra.mxu0 0
  %789 = vmatprep.subr.bf16.mxu0 0
  %790 = vmatpush1.bf16.msra.mxu0 0
  %791 = vmatprep.subr.bf16.mxu0 0
  %792 = vmatpush1.bf16.msra.mxu0 0
  %793 = vmatprep.mubr.bf16.mxu0 0
  %794 = vmatmul.mubr.bf16.gmra.mrb[0].mxu0 0
  %v795 = vpop.f32.mrb[0].mxu0
  %v796 = vadd.f32 0.0, %v795
  %v797 = vpop.f32.mrb[0].mxu0
  %v798 = vadd.f32 0.0, %v797
  %v799 = vpop.f32.mrb[0].mxu0
  %v800 = vpop.f32.mrb[0].mxu0
  %801 = vdwg.mxu0
  %v802 = vadd.f32 %v477, %v755
  %v803 = vadd.f32 %v479, %v757
  %v804 = vadd.f32 %v520, %v796
  %v805 = vadd.f32 %v522, %v798
  %v806 = vmul.f32 %v802, 0.5
  %v807 = vmul.f32 %v803, 0.5
  %v808 = vmul.f32 %v804, 0.5
  %v809 = vtanh.pop %v806
  %v810 = vtanh.pop %v807
  %v811 = vtanh.pop %v808
  %v812 = vmul.f32 %v809, 0.5
  %v813 = vmul.f32 %v810, 0.5
  %v814 = vmul.f32 %v811, 0.5
  %v815 = vadd.f32 %v812, 0.5
  %v816 = vadd.f32 %v813, 0.5
  %v817 = vadd.f32 %v814, 0.5
  %v818 = vtanh.pop %v805
  %v819 = vmul.f32 %v816, 0.0
  %v820 = vmul.f32 %v815, %v818
  %v821 = vadd.f32 %v819, %v820
  %v822 = vtanh.pop %v821
  %v823 = vmul.f32 %v817, %v822
  %v824 = vpack.c.bf16 %v823, %v823
  %825 = vmatprep.subr.bf16.mxu0 %v657
  %826 = vmatpush1.bf16.msra.mxu0 %v656
  %827 = vmatprep.subr.bf16.mxu0 %v661
  %828 = vmatpush1.bf16.msra.mxu0 %v660
  %829 = vmatprep.subr.bf16.mxu0 %v665
  %830 = vmatpush1.bf16.msra.mxu0 %v664
  %831 = vmatprep.subr.bf16.mxu0 %v669
  %832 = vmatpush1.bf16.msra.mxu0 %v668
  %833 = vmatprep.subr.bf16.mxu0 %v673
  %834 = vmatpush1.bf16.msra.mxu0 %v672
  %835 = vmatprep.subr.bf16.mxu0 %v677
  %836 = vmatpush1.bf16.msra.mxu0 %v676
  %837 = vmatprep.subr.bf16.mxu0 %v681
  %838 = vmatpush1.bf16.msra.mxu0 %v680
  %839 = vmatprep.subr.bf16.mxu0 %v685
  %840 = vmatpush1.bf16.msra.mxu0 %v684
  %841 = vmatprep.subr.bf16.mxu0 0
  %842 = vmatpush1.bf16.msra.mxu0 0
  %843 = vmatprep.subr.bf16.mxu0 0
  %844 = vmatpush1.bf16.msra.mxu0 0
  %845 = vmatprep.subr.bf16.mxu0 0
  %846 = vmatpush1.bf16.msra.mxu0 0
  %847 = vmatprep.subr.bf16.mxu0 0
  %848 = vmatpush1.bf16.msra.mxu0 0
  %849 = vmatprep.subr.bf16.mxu0 0
  %850 = vmatpush1.bf16.msra.mxu0 0
  %851 = vmatprep.subr.bf16.mxu0 0
  %852 = vmatpush1.bf16.msra.mxu0 0
  %853 = vmatprep.subr.bf16.mxu0 0
  %854 = vmatpush1.bf16.msra.mxu0 0
  %855 = vmatprep.subr.bf16.mxu0 0
  %856 = vmatpush1.bf16.msra.mxu0 0
  %857 = vmatprep.mubr.bf16.mxu0 0
  %858 = vmatmul.mubr.bf16.gmra.mrb[0].mxu0 %v824
  %v859 = vpop.f32.mrb[0].mxu0
  %v860 = vadd.f32 0.0, %v859
  %v861 = vpop.f32.mrb[0].mxu0
  %v862 = vadd.f32 0.0, %v861
  %v863 = vpop.f32.mrb[0].mxu0
  %v864 = vpop.f32.mrb[0].mxu0
  %865 = vdwg.mxu0
  %866 = vmatprep.subr.bf16.mxu0 %v659
  %867 = vmatpush1.bf16.msra.mxu0 %v658
  %868 = vmatprep.subr.bf16.mxu0 %v663
  %869 = vmatpush1.bf16.msra.mxu0 %v662
  %870 = vmatprep.subr.bf16.mxu0 %v667
  %871 = vmatpush1.bf16.msra.mxu0 %v666
  %872 = vmatprep.subr.bf16.mxu0 %v671
  %873 = vmatpush1.bf16.msra.mxu0 %v670
  %874 = vmatprep.subr.bf16.mxu0 %v675
  %875 = vmatpush1.bf16.msra.mxu0 %v674
  %876 = vmatprep.subr.bf16.mxu0 %v679
  %877 = vmatpush1.bf16.msra.mxu0 %v678
  %878 = vmatprep.subr.bf16.mxu0 %v683
  %879 = vmatpush1.bf16.msra.mxu0 %v682
  %880 = vmatprep.subr.bf16.mxu0 %v687
  %881 = vmatpush1.bf16.msra.mxu0 %v686
  %882 = vmatprep.subr.bf16.mxu0 0
  %883 = vmatpush1.bf16.msra.mxu0 0
  %884 = vmatprep.subr.bf16.mxu0 0
  %885 = vmatpush1.bf16.msra.mxu0 0
  %886 = vmatprep.subr.bf16.mxu0 0
  %887 = vmatpush1.bf16.msra.mxu0 0
  %888 = vmatprep.subr.bf16.mxu0 0
  %889 = vmatpush1.bf16.msra.mxu0 0
  %890 = vmatprep.subr.bf16.mxu0 0
  %891 = vmatpush1.bf16.msra.mxu0 0
  %892 = vmatprep.subr.bf16.mxu0 0
  %893 = vmatpush1.bf16.msra.mxu0 0
  %894 = vmatprep.subr.bf16.mxu0 0
  %895 = vmatpush1.bf16.msra.mxu0 0
  %896 = vmatprep.subr.bf16.mxu0 0
  %897 = vmatpush1.bf16.msra.mxu0 0
  %898 = vmatprep.mubr.bf16.mxu0 0
  %899 = vmatmul.mubr.bf16.gmra.mrb[0].mxu0 %v824
  %v900 = vpop.f32.mrb[0].mxu0
  %v901 = vadd.f32 0.0, %v900
  %v902 = vpop.f32.mrb[0].mxu0
  %v903 = vadd.f32 0.0, %v902
  %v904 = vpop.f32.mrb[0].mxu0
  %v905 = vpop.f32.mrb[0].mxu0
  %906 = vdwg.mxu0
  %v911 = vrot.slane %v860, 6
  %v912 = vrot.slane %v862, 6
  %v913 = vrot.slane %v901, 6
  %v914 = vrot.slane %v903, 6
  %v919 = vadd.f32 %v477, %v911
  %v920 = vadd.f32 %v479, %v912
  %v921 = vadd.f32 %v520, %v913
  %v922 = vadd.f32 %v522, %v914
  %v923 = vmul.f32 %v919, 0.5
  %v924 = vmul.f32 %v920, 0.5
  %v925 = vmul.f32 %v921, 0.5
  %v926 = vtanh.pop %v923
  %v927 = vtanh.pop %v924
  %v928 = vtanh.pop %v925
  %v929 = vmul.f32 %v926, 0.5
  %v930 = vmul.f32 %v927, 0.5
  %v931 = vmul.f32 %v928, 0.5
  %v932 = vadd.f32 %v929, 0.5
  %v933 = vadd.f32 %v930, 0.5
  %v934 = vadd.f32 %v931, 0.5
  %v935 = vtanh.pop %v922
  %v937 = vrot.slane %v821, 6
  %v939 = vmul.f32 %v933, %v937
  %v940 = vmul.f32 %v932, %v935
  %v941 = vadd.f32 %v939, %v940
  %v942 = vtanh.pop %v941
  %v943 = vmul.f32 %v934, %v942
  %v944 = vpack.c.bf16 %v943, %v943
  %v946 = vrot.slane %v944, 1
  %948 = vmatprep.subr.bf16.mxu0 %v657
  %949 = vmatpush1.bf16.msra.mxu0 %v656
  %950 = vmatprep.subr.bf16.mxu0 %v661
  %951 = vmatpush1.bf16.msra.mxu0 %v660
  %952 = vmatprep.subr.bf16.mxu0 %v665
  %953 = vmatpush1.bf16.msra.mxu0 %v664
  %954 = vmatprep.subr.bf16.mxu0 %v669
  %955 = vmatpush1.bf16.msra.mxu0 %v668
  %956 = vmatprep.subr.bf16.mxu0 %v673
  %957 = vmatpush1.bf16.msra.mxu0 %v672
  %958 = vmatprep.subr.bf16.mxu0 %v677
  %959 = vmatpush1.bf16.msra.mxu0 %v676
  %960 = vmatprep.subr.bf16.mxu0 %v681
  %961 = vmatpush1.bf16.msra.mxu0 %v680
  %962 = vmatprep.subr.bf16.mxu0 %v685
  %963 = vmatpush1.bf16.msra.mxu0 %v684
  %964 = vmatprep.subr.bf16.mxu0 0
  %965 = vmatpush1.bf16.msra.mxu0 0
  %966 = vmatprep.subr.bf16.mxu0 0
  %967 = vmatpush1.bf16.msra.mxu0 0
  %968 = vmatprep.subr.bf16.mxu0 0
  %969 = vmatpush1.bf16.msra.mxu0 0
  %970 = vmatprep.subr.bf16.mxu0 0
  %971 = vmatpush1.bf16.msra.mxu0 0
  %972 = vmatprep.subr.bf16.mxu0 0
  %973 = vmatpush1.bf16.msra.mxu0 0
  %974 = vmatprep.subr.bf16.mxu0 0
  %975 = vmatpush1.bf16.msra.mxu0 0
  %976 = vmatprep.subr.bf16.mxu0 0
  %977 = vmatpush1.bf16.msra.mxu0 0
  %978 = vmatprep.subr.bf16.mxu0 0
  %979 = vmatpush1.bf16.msra.mxu0 0
  %980 = vmatprep.mubr.bf16.mxu0 0
  %981 = vmatmul.mubr.bf16.gmra.mrb[0].mxu0 %v946
  %v982 = vpop.f32.mrb[0].mxu0
  %v983 = vadd.f32 0.0, %v982
  %v984 = vpop.f32.mrb[0].mxu0
  %v985 = vadd.f32 0.0, %v984
  %v986 = vpop.f32.mrb[0].mxu0
  %v987 = vpop.f32.mrb[0].mxu0
  %988 = vdwg.mxu0
  %989 = vmatprep.subr.bf16.mxu0 %v659
  %990 = vmatpush1.bf16.msra.mxu0 %v658
  %991 = vmatprep.subr.bf16.mxu0 %v663
  %992 = vmatpush1.bf16.msra.mxu0 %v662
  %993 = vmatprep.subr.bf16.mxu0 %v667
  %994 = vmatpush1.bf16.msra.mxu0 %v666
  %995 = vmatprep.subr.bf16.mxu0 %v671
  %996 = vmatpush1.bf16.msra.mxu0 %v670
  %997 = vmatprep.subr.bf16.mxu0 %v675
  %998 = vmatpush1.bf16.msra.mxu0 %v674
  %999 = vmatprep.subr.bf16.mxu0 %v679
  %1000 = vmatpush1.bf16.msra.mxu0 %v678
  %1001 = vmatprep.subr.bf16.mxu0 %v683
  %1002 = vmatpush1.bf16.msra.mxu0 %v682
  %1003 = vmatprep.subr.bf16.mxu0 %v687
  %1004 = vmatpush1.bf16.msra.mxu0 %v686
  %1005 = vmatprep.subr.bf16.mxu0 0
  %1006 = vmatpush1.bf16.msra.mxu0 0
  %1007 = vmatprep.subr.bf16.mxu0 0
  %1008 = vmatpush1.bf16.msra.mxu0 0
  %1009 = vmatprep.subr.bf16.mxu0 0
  %1010 = vmatpush1.bf16.msra.mxu0 0
  %1011 = vmatprep.subr.bf16.mxu0 0
  %1012 = vmatpush1.bf16.msra.mxu0 0
  %1013 = vmatprep.subr.bf16.mxu0 0
  %1014 = vmatpush1.bf16.msra.mxu0 0
  %1015 = vmatprep.subr.bf16.mxu0 0
  %1016 = vmatpush1.bf16.msra.mxu0 0
  %1017 = vmatprep.subr.bf16.mxu0 0
  %1018 = vmatpush1.bf16.msra.mxu0 0
  %1019 = vmatprep.subr.bf16.mxu0 0
  %1020 = vmatpush1.bf16.msra.mxu0 0
  %1021 = vmatprep.mubr.bf16.mxu0 0
  %1022 = vmatmul.mubr.bf16.gmra.mrb[0].mxu0 %v946
  %v1023 = vpop.f32.mrb[0].mxu0
  %v1024 = vadd.f32 0.0, %v1023
  %v1025 = vpop.f32.mrb[0].mxu0
  %v1026 = vadd.f32 0.0, %v1025
  %v1027 = vpop.f32.mrb[0].mxu0
  %v1028 = vpop.f32.mrb[0].mxu0
  %1029 = vdwg.mxu0
  %v1034 = vrot.slane %v983, 4
  %v1035 = vrot.slane %v985, 4
  %v1036 = vrot.slane %v1024, 4
  %v1037 = vrot.slane %v1026, 4
  %v1042 = vadd.f32 %v477, %v1034
  %v1043 = vadd.f32 %v479, %v1035
  %v1044 = vadd.f32 %v520, %v1036
  %v1045 = vadd.f32 %v522, %v1037
  %v1046 = vmul.f32 %v1042, 0.5
  %v1047 = vmul.f32 %v1043, 0.5
  %v1048 = vmul.f32 %v1044, 0.5
  %v1049 = vtanh.pop %v1046
  %v1050 = vtanh.pop %v1047
  %v1051 = vtanh.pop %v1048
  %v1052 = vmul.f32 %v1049, 0.5
  %v1053 = vmul.f32 %v1050, 0.5
  %v1054 = vmul.f32 %v1051, 0.5
  %v1055 = vadd.f32 %v1052, 0.5
  %v1056 = vadd.f32 %v1053, 0.5
  %v1057 = vadd.f32 %v1054, 0.5
  %v1058 = vtanh.pop %v1045
  %v1060 = vrot.slane %v941, 6
  %v1062 = vmul.f32 %v1056, %v1060
  %v1063 = vmul.f32 %v1055, %v1058
  %v1064 = vadd.f32 %v1062, %v1063
  %v1065 = vtanh.pop %v1064
  %v1066 = vmul.f32 %v1057, %v1065
  %v1067 = vpack.c.bf16 %v1066, %v1066
  %v1069 = vrot.slane %v1067, 2
  %1071 = vmatprep.subr.bf16.mxu0 %v657
  %1072 = vmatpush1.bf16.msra.mxu0 %v656
  %1073 = vmatprep.subr.bf16.mxu0 %v661
  %1074 = vmatpush1.bf16.msra.mxu0 %v660
  %1075 = vmatprep.subr.bf16.mxu0 %v665
  %1076 = vmatpush1.bf16.msra.mxu0 %v664
  %1077 = vmatprep.subr.bf16.mxu0 %v669
  %1078 = vmatpush1.bf16.msra.mxu0 %v668
  %1079 = vmatprep.subr.bf16.mxu0 %v673
  %1080 = vmatpush1.bf16.msra.mxu0 %v672
  %1081 = vmatprep.subr.bf16.mxu0 %v677
  %1082 = vmatpush1.bf16.msra.mxu0 %v676
  %1083 = vmatprep.subr.bf16.mxu0 %v681
  %1084 = vmatpush1.bf16.msra.mxu0 %v680
  %1085 = vmatprep.subr.bf16.mxu0 %v685
  %1086 = vmatpush1.bf16.msra.mxu0 %v684
  %1087 = vmatprep.subr.bf16.mxu0 0
  %1088 = vmatpush1.bf16.msra.mxu0 0
  %1089 = vmatprep.subr.bf16.mxu0 0
  %1090 = vmatpush1.bf16.msra.mxu0 0
  %1091 = vmatprep.subr.bf16.mxu0 0
  %1092 = vmatpush1.bf16.msra.mxu0 0
  %1093 = vmatprep.subr.bf16.mxu0 0
  %1094 = vmatpush1.bf16.msra.mxu0 0
  %1095 = vmatprep.subr.bf16.mxu0 0
  %1096 = vmatpush1.bf16.msra.mxu0 0
  %1097 = vmatprep.subr.bf16.mxu0 0
  %1098 = vmatpush1.bf16.msra.mxu0 0
  %1099 = vmatprep.subr.bf16.mxu0 0
  %1100 = vmatpush1.bf16.msra.mxu0 0
  %1101 = vmatprep.subr.bf16.mxu0 0
  %1102 = vmatpush1.bf16.msra.mxu0 0
  %1103 = vmatprep.mubr.bf16.mxu0 0
  %1104 = vmatmul.mubr.bf16.gmra.mrb[0].mxu0 %v1069
  %v1105 = vpop.f32.mrb[0].mxu0
  %v1106 = vadd.f32 0.0, %v1105
  %v1107 = vpop.f32.mrb[0].mxu0
  %v1108 = vadd.f32 0.0, %v1107
  %v1109 = vpop.f32.mrb[0].mxu0
  %v1110 = vpop.f32.mrb[0].mxu0
  %1111 = vdwg.mxu0
  %1112 = vmatprep.subr.bf16.mxu0 %v659
  %1113 = vmatpush1.bf16.msra.mxu0 %v658
  %1114 = vmatprep.subr.bf16.mxu0 %v663
  %1115 = vmatpush1.bf16.msra.mxu0 %v662
  %1116 = vmatprep.subr.bf16.mxu0 %v667
  %1117 = vmatpush1.bf16.msra.mxu0 %v666
  %1118 = vmatprep.subr.bf16.mxu0 %v671
  %1119 = vmatpush1.bf16.msra.mxu0 %v670
  %1120 = vmatprep.subr.bf16.mxu0 %v675
  %1121 = vmatpush1.bf16.msra.mxu0 %v674
  %1122 = vmatprep.subr.bf16.mxu0 %v679
  %1123 = vmatpush1.bf16.msra.mxu0 %v678
  %1124 = vmatprep.subr.bf16.mxu0 %v683
  %1125 = vmatpush1.bf16.msra.mxu0 %v682
  %1126 = vmatprep.subr.bf16.mxu0 %v687
  %1127 = vmatpush1.bf16.msra.mxu0 %v686
  %1128 = vmatprep.subr.bf16.mxu0 0
  %1129 = vmatpush1.bf16.msra.mxu0 0
  %1130 = vmatprep.subr.bf16.mxu0 0
  %1131 = vmatpush1.bf16.msra.mxu0 0
  %1132 = vmatprep.subr.bf16.mxu0 0
  %1133 = vmatpush1.bf16.msra.mxu0 0
  %1134 = vmatprep.subr.bf16.mxu0 0
  %1135 = vmatpush1.bf16.msra.mxu0 0
  %1136 = vmatprep.subr.bf16.mxu0 0
  %1137 = vmatpush1.bf16.msra.mxu0 0
  %1138 = vmatprep.subr.bf16.mxu0 0
  %1139 = vmatpush1.bf16.msra.mxu0 0
  %1140 = vmatprep.subr.bf16.mxu0 0
  %1141 = vmatpush1.bf16.msra.mxu0 0
  %1142 = vmatprep.subr.bf16.mxu0 0
  %1143 = vmatpush1.bf16.msra.mxu0 0
  %1144 = vmatprep.mubr.bf16.mxu0 0
  %1145 = vmatmul.mubr.bf16.gmra.mrb[0].mxu0 %v1069
  %v1146 = vpop.f32.mrb[0].mxu0
  %v1147 = vadd.f32 0.0, %v1146
  %v1148 = vpop.f32.mrb[0].mxu0
  %v1149 = vadd.f32 0.0, %v1148
  %v1150 = vpop.f32.mrb[0].mxu0
  %v1151 = vpop.f32.mrb[0].mxu0
  %1152 = vdwg.mxu0
  %v1157 = vrot.slane %v1106, 2
  %v1158 = vrot.slane %v1108, 2
  %v1159 = vrot.slane %v1147, 2
  %v1160 = vrot.slane %v1149, 2
  %v1165 = vadd.f32 %v477, %v1157
  %v1166 = vadd.f32 %v479, %v1158
  %v1167 = vadd.f32 %v520, %v1159
  %v1168 = vadd.f32 %v522, %v1160
  %v1169 = vmul.f32 %v1165, 0.5
  %v1170 = vmul.f32 %v1166, 0.5
  %v1171 = vmul.f32 %v1167, 0.5
  %v1172 = vtanh.pop %v1169
  %v1173 = vtanh.pop %v1170
  %v1174 = vtanh.pop %v1171
  %v1175 = vmul.f32 %v1172, 0.5
  %v1176 = vmul.f32 %v1173, 0.5
  %v1177 = vmul.f32 %v1174, 0.5
  %v1178 = vadd.f32 %v1175, 0.5
  %v1179 = vadd.f32 %v1176, 0.5
  %v1180 = vadd.f32 %v1177, 0.5
  %v1181 = vtanh.pop %v1168
  %v1183 = vrot.slane %v1064, 6
  %v1185 = vmul.f32 %v1179, %v1183
  %v1186 = vmul.f32 %v1178, %v1181
  %v1187 = vadd.f32 %v1185, %v1186
  %v1188 = vtanh.pop %v1187
  %v1189 = vmul.f32 %v1180, %v1188
  %v1190 = vpack.c.bf16 %v1189, %v1189
  %v1192 = vrot.slane %v1190, 3
  %1194 = vmatprep.subr.bf16.mxu0 %v657
  %1195 = vmatpush1.bf16.msra.mxu0 %v656
  %1196 = vmatprep.subr.bf16.mxu0 %v661
  %1197 = vmatpush1.bf16.msra.mxu0 %v660
  %1198 = vmatprep.subr.bf16.mxu0 %v665
  %1199 = vmatpush1.bf16.msra.mxu0 %v664
  %1200 = vmatprep.subr.bf16.mxu0 %v669
  %1201 = vmatpush1.bf16.msra.mxu0 %v668
  %1202 = vmatprep.subr.bf16.mxu0 %v673
  %1203 = vmatpush1.bf16.msra.mxu0 %v672
  %1204 = vmatprep.subr.bf16.mxu0 %v677
  %1205 = vmatpush1.bf16.msra.mxu0 %v676
  %1206 = vmatprep.subr.bf16.mxu0 %v681
  %1207 = vmatpush1.bf16.msra.mxu0 %v680
  %1208 = vmatprep.subr.bf16.mxu0 %v685
  %1209 = vmatpush1.bf16.msra.mxu0 %v684
  %1210 = vmatprep.subr.bf16.mxu0 0
  %1211 = vmatpush1.bf16.msra.mxu0 0
  %1212 = vmatprep.subr.bf16.mxu0 0
  %1213 = vmatpush1.bf16.msra.mxu0 0
  %1214 = vmatprep.subr.bf16.mxu0 0
  %1215 = vmatpush1.bf16.msra.mxu0 0
  %1216 = vmatprep.subr.bf16.mxu0 0
  %1217 = vmatpush1.bf16.msra.mxu0 0
  %1218 = vmatprep.subr.bf16.mxu0 0
  %1219 = vmatpush1.bf16.msra.mxu0 0
  %1220 = vmatprep.subr.bf16.mxu0 0
  %1221 = vmatpush1.bf16.msra.mxu0 0
  %1222 = vmatprep.subr.bf16.mxu0 0
  %1223 = vmatpush1.bf16.msra.mxu0 0
  %1224 = vmatprep.subr.bf16.mxu0 0
  %1225 = vmatpush1.bf16.msra.mxu0 0
  %1226 = vmatprep.mubr.bf16.mxu0 0
  %1227 = vmatmul.mubr.bf16.gmra.mrb[0].mxu0 %v1192
  %v1228 = vpop.f32.mrb[0].mxu0
  %v1229 = vadd.f32 0.0, %v1228
  %v1230 = vpop.f32.mrb[0].mxu0
  %v1231 = vadd.f32 0.0, %v1230
  %v1232 = vpop.f32.mrb[0].mxu0
  %v1233 = vpop.f32.mrb[0].mxu0
  %1234 = vdwg.mxu0
  %1235 = vmatprep.subr.bf16.mxu0 %v659
  %1236 = vmatpush1.bf16.msra.mxu0 %v658
  %1237 = vmatprep.subr.bf16.mxu0 %v663
  %1238 = vmatpush1.bf16.msra.mxu0 %v662
  %1239 = vmatprep.subr.bf16.mxu0 %v667
  %1240 = vmatpush1.bf16.msra.mxu0 %v666
  %1241 = vmatprep.subr.bf16.mxu0 %v671
  %1242 = vmatpush1.bf16.msra.mxu0 %v670
  %1243 = vmatprep.subr.bf16.mxu0 %v675
  %1244 = vmatpush1.bf16.msra.mxu0 %v674
  %1245 = vmatprep.subr.bf16.mxu0 %v679
  %1246 = vmatpush1.bf16.msra.mxu0 %v678
  %1247 = vmatprep.subr.bf16.mxu0 %v683
  %1248 = vmatpush1.bf16.msra.mxu0 %v682
  %1249 = vmatprep.subr.bf16.mxu0 %v687
  %1250 = vmatpush1.bf16.msra.mxu0 %v686
  %1251 = vmatprep.subr.bf16.mxu0 0
  %1252 = vmatpush1.bf16.msra.mxu0 0
  %1253 = vmatprep.subr.bf16.mxu0 0
  %1254 = vmatpush1.bf16.msra.mxu0 0
  %1255 = vmatprep.subr.bf16.mxu0 0
  %1256 = vmatpush1.bf16.msra.mxu0 0
  %1257 = vmatprep.subr.bf16.mxu0 0
  %1258 = vmatpush1.bf16.msra.mxu0 0
  %1259 = vmatprep.subr.bf16.mxu0 0
  %1260 = vmatpush1.bf16.msra.mxu0 0
  %1261 = vmatprep.subr.bf16.mxu0 0
  %1262 = vmatpush1.bf16.msra.mxu0 0
  %1263 = vmatprep.subr.bf16.mxu0 0
  %1264 = vmatpush1.bf16.msra.mxu0 0
  %1265 = vmatprep.subr.bf16.mxu0 0
  %1266 = vmatpush1.bf16.msra.mxu0 0
  %1267 = vmatprep.mubr.bf16.mxu0 0
  %1268 = vmatmul.mubr.bf16.gmra.mrb[0].mxu0 %v1192
  %v1269 = vpop.f32.mrb[0].mxu0
  %v1270 = vadd.f32 0.0, %v1269
  %v1271 = vpop.f32.mrb[0].mxu0
  %v1272 = vadd.f32 0.0, %v1271
  %v1273 = vpop.f32.mrb[0].mxu0
  %v1274 = vpop.f32.mrb[0].mxu0
  %1275 = vdwg.mxu0
  %v1276 = vadd.f32 %v481, %v1229
  %v1277 = vadd.f32 %v483, %v1231
  %v1278 = vadd.f32 %v524, %v1270
  %v1279 = vadd.f32 %v526, %v1272
  %v1280 = vmul.f32 %v1276, 0.5
  %v1281 = vmul.f32 %v1277, 0.5
  %v1282 = vmul.f32 %v1278, 0.5
  %v1283 = vtanh.pop %v1280
  %v1284 = vtanh.pop %v1281
  %v1285 = vtanh.pop %v1282
  %v1286 = vmul.f32 %v1283, 0.5
  %v1287 = vmul.f32 %v1284, 0.5
  %v1288 = vmul.f32 %v1285, 0.5
  %v1289 = vadd.f32 %v1286, 0.5
  %v1290 = vadd.f32 %v1287, 0.5
  %v1291 = vadd.f32 %v1288, 0.5
  %v1292 = vtanh.pop %v1279
  %v1294 = vrot.slane %v1187, 6
  %v1296 = vmul.f32 %v1290, %v1294
  %v1297 = vmul.f32 %v1289, %v1292
  %v1298 = vadd.f32 %v1296, %v1297
  %v1299 = vtanh.pop %v1298
  %v1300 = vmul.f32 %v1291, %v1299
  %v1301 = vpack.c.bf16 %v1300, %v1300
  %1302 = vmatprep.subr.bf16.mxu0 %v657
  %1303 = vmatpush1.bf16.msra.mxu0 %v656
  %1304 = vmatprep.subr.bf16.mxu0 %v661
  %1305 = vmatpush1.bf16.msra.mxu0 %v660
  %1306 = vmatprep.subr.bf16.mxu0 %v665
  %1307 = vmatpush1.bf16.msra.mxu0 %v664
  %1308 = vmatprep.subr.bf16.mxu0 %v669
  %1309 = vmatpush1.bf16.msra.mxu0 %v668
  %1310 = vmatprep.subr.bf16.mxu0 %v673
  %1311 = vmatpush1.bf16.msra.mxu0 %v672
  %1312 = vmatprep.subr.bf16.mxu0 %v677
  %1313 = vmatpush1.bf16.msra.mxu0 %v676
  %1314 = vmatprep.subr.bf16.mxu0 %v681
  %1315 = vmatpush1.bf16.msra.mxu0 %v680
  %1316 = vmatprep.subr.bf16.mxu0 %v685
  %1317 = vmatpush1.bf16.msra.mxu0 %v684
  %1318 = vmatprep.subr.bf16.mxu0 0
  %1319 = vmatpush1.bf16.msra.mxu0 0
  %1320 = vmatprep.subr.bf16.mxu0 0
  %1321 = vmatpush1.bf16.msra.mxu0 0
  %1322 = vmatprep.subr.bf16.mxu0 0
  %1323 = vmatpush1.bf16.msra.mxu0 0
  %1324 = vmatprep.subr.bf16.mxu0 0
  %1325 = vmatpush1.bf16.msra.mxu0 0
  %1326 = vmatprep.subr.bf16.mxu0 0
  %1327 = vmatpush1.bf16.msra.mxu0 0
  %1328 = vmatprep.subr.bf16.mxu0 0
  %1329 = vmatpush1.bf16.msra.mxu0 0
  %1330 = vmatprep.subr.bf16.mxu0 0
  %1331 = vmatpush1.bf16.msra.mxu0 0
  %1332 = vmatprep.subr.bf16.mxu0 0
  %1333 = vmatpush1.bf16.msra.mxu0 0
  %1334 = vmatprep.mubr.bf16.mxu0 0
  %1335 = vmatmul.mubr.bf16.gmra.mrb[0].mxu0 %v1301
  %v1336 = vpop.f32.mrb[0].mxu0
  %v1337 = vadd.f32 0.0, %v1336
  %v1338 = vpop.f32.mrb[0].mxu0
  %v1339 = vadd.f32 0.0, %v1338
  %v1340 = vpop.f32.mrb[0].mxu0
  %v1341 = vpop.f32.mrb[0].mxu0
  %1342 = vdwg.mxu0
  %1343 = vmatprep.subr.bf16.mxu0 %v659
  %1344 = vmatpush1.bf16.msra.mxu0 %v658
  %1345 = vmatprep.subr.bf16.mxu0 %v663
  %1346 = vmatpush1.bf16.msra.mxu0 %v662
  %1347 = vmatprep.subr.bf16.mxu0 %v667
  %1348 = vmatpush1.bf16.msra.mxu0 %v666
  %1349 = vmatprep.subr.bf16.mxu0 %v671
  %1350 = vmatpush1.bf16.msra.mxu0 %v670
  %1351 = vmatprep.subr.bf16.mxu0 %v675
  %1352 = vmatpush1.bf16.msra.mxu0 %v674
  %1353 = vmatprep.subr.bf16.mxu0 %v679
  %1354 = vmatpush1.bf16.msra.mxu0 %v678
  %1355 = vmatprep.subr.bf16.mxu0 %v683
  %1356 = vmatpush1.bf16.msra.mxu0 %v682
  %1357 = vmatprep.subr.bf16.mxu0 %v687
  %1358 = vmatpush1.bf16.msra.mxu0 %v686
  %1359 = vmatprep.subr.bf16.mxu0 0
  %1360 = vmatpush1.bf16.msra.mxu0 0
  %1361 = vmatprep.subr.bf16.mxu0 0
  %1362 = vmatpush1.bf16.msra.mxu0 0
  %1363 = vmatprep.subr.bf16.mxu0 0
  %1364 = vmatpush1.bf16.msra.mxu0 0
  %1365 = vmatprep.subr.bf16.mxu0 0
  %1366 = vmatpush1.bf16.msra.mxu0 0
  %1367 = vmatprep.subr.bf16.mxu0 0
  %1368 = vmatpush1.bf16.msra.mxu0 0
  %1369 = vmatprep.subr.bf16.mxu0 0
  %1370 = vmatpush1.bf16.msra.mxu0 0
  %1371 = vmatprep.subr.bf16.mxu0 0
  %1372 = vmatpush1.bf16.msra.mxu0 0
  %1373 = vmatprep.subr.bf16.mxu0 0
  %1374 = vmatpush1.bf16.msra.mxu0 0
  %1375 = vmatprep.mubr.bf16.mxu0 0
  %1376 = vmatmul.mubr.bf16.gmra.mrb[0].mxu0 %v1301
  %v1377 = vpop.f32.mrb[0].mxu0
  %v1378 = vadd.f32 0.0, %v1377
  %v1379 = vpop.f32.mrb[0].mxu0
  %v1380 = vadd.f32 0.0, %v1379
  %v1381 = vpop.f32.mrb[0].mxu0
  %v1382 = vpop.f32.mrb[0].mxu0
  %1383 = vdwg.mxu0
  %v1388 = vrot.slane %v1337, 6
  %v1389 = vrot.slane %v1339, 6
  %v1390 = vrot.slane %v1378, 6
  %v1391 = vrot.slane %v1380, 6
  %v1396 = vadd.f32 %v481, %v1388
  %v1397 = vadd.f32 %v483, %v1389
  %v1398 = vadd.f32 %v524, %v1390
  %v1399 = vadd.f32 %v526, %v1391
  %v1400 = vmul.f32 %v1396, 0.5
  %v1401 = vmul.f32 %v1397, 0.5
  %v1402 = vmul.f32 %v1398, 0.5
  %v1403 = vtanh.pop %v1400
  %v1404 = vtanh.pop %v1401
  %v1405 = vtanh.pop %v1402
  %v1406 = vmul.f32 %v1403, 0.5
  %v1407 = vmul.f32 %v1404, 0.5
  %v1408 = vmul.f32 %v1405, 0.5
  %v1409 = vadd.f32 %v1406, 0.5
  %v1410 = vadd.f32 %v1407, 0.5
  %v1411 = vadd.f32 %v1408, 0.5
  %v1412 = vtanh.pop %v1399
  %v1414 = vrot.slane %v1298, 6
  %v1416 = vmul.f32 %v1410, %v1414
  %v1417 = vmul.f32 %v1409, %v1412
  %v1418 = vadd.f32 %v1416, %v1417
  %v1419 = vtanh.pop %v1418
  %v1420 = vmul.f32 %v1411, %v1419
  %v1421 = vpack.c.bf16 %v1420, %v1420
  %v1423 = vrot.slane %v1421, 1
  %1425 = vmatprep.subr.bf16.mxu0 %v657
  %1426 = vmatpush1.bf16.msra.mxu0 %v656
  %1427 = vmatprep.subr.bf16.mxu0 %v661
  %1428 = vmatpush1.bf16.msra.mxu0 %v660
  %1429 = vmatprep.subr.bf16.mxu0 %v665
  %1430 = vmatpush1.bf16.msra.mxu0 %v664
  %1431 = vmatprep.subr.bf16.mxu0 %v669
  %1432 = vmatpush1.bf16.msra.mxu0 %v668
  %1433 = vmatprep.subr.bf16.mxu0 %v673
  %1434 = vmatpush1.bf16.msra.mxu0 %v672
  %1435 = vmatprep.subr.bf16.mxu0 %v677
  %1436 = vmatpush1.bf16.msra.mxu0 %v676
  %1437 = vmatprep.subr.bf16.mxu0 %v681
  %1438 = vmatpush1.bf16.msra.mxu0 %v680
  %1439 = vmatprep.subr.bf16.mxu0 %v685
  %1440 = vmatpush1.bf16.msra.mxu0 %v684
  %1441 = vmatprep.subr.bf16.mxu0 0
  %1442 = vmatpush1.bf16.msra.mxu0 0
  %1443 = vmatprep.subr.bf16.mxu0 0
  %1444 = vmatpush1.bf16.msra.mxu0 0
  %1445 = vmatprep.subr.bf16.mxu0 0
  %1446 = vmatpush1.bf16.msra.mxu0 0
  %1447 = vmatprep.subr.bf16.mxu0 0
  %1448 = vmatpush1.bf16.msra.mxu0 0
  %1449 = vmatprep.subr.bf16.mxu0 0
  %1450 = vmatpush1.bf16.msra.mxu0 0
  %1451 = vmatprep.subr.bf16.mxu0 0
  %1452 = vmatpush1.bf16.msra.mxu0 0
  %1453 = vmatprep.subr.bf16.mxu0 0
  %1454 = vmatpush1.bf16.msra.mxu0 0
  %1455 = vmatprep.subr.bf16.mxu0 0
  %1456 = vmatpush1.bf16.msra.mxu0 0
  %1457 = vmatprep.mubr.bf16.mxu0 0
  %1458 = vmatmul.mubr.bf16.gmra.mrb[0].mxu0 %v1423
  %v1459 = vpop.f32.mrb[0].mxu0
  %v1460 = vadd.f32 0.0, %v1459
  %v1461 = vpop.f32.mrb[0].mxu0
  %v1462 = vadd.f32 0.0, %v1461
  %v1463 = vpop.f32.mrb[0].mxu0
  %v1464 = vpop.f32.mrb[0].mxu0
  %1465 = vdwg.mxu0
  %1466 = vmatprep.subr.bf16.mxu0 %v659
  %1467 = vmatpush1.bf16.msra.mxu0 %v658
  %1468 = vmatprep.subr.bf16.mxu0 %v663
  %1469 = vmatpush1.bf16.msra.mxu0 %v662
  %1470 = vmatprep.subr.bf16.mxu0 %v667
  %1471 = vmatpush1.bf16.msra.mxu0 %v666
  %1472 = vmatprep.subr.bf16.mxu0 %v671
  %1473 = vmatpush1.bf16.msra.mxu0 %v670
  %1474 = vmatprep.subr.bf16.mxu0 %v675
  %1475 = vmatpush1.bf16.msra.mxu0 %v674
  %1476 = vmatprep.subr.bf16.mxu0 %v679
  %1477 = vmatpush1.bf16.msra.mxu0 %v678
  %1478 = vmatprep.subr.bf16.mxu0 %v683
  %1479 = vmatpush1.bf16.msra.mxu0 %v682
  %1480 = vmatprep.subr.bf16.mxu0 %v687
  %1481 = vmatpush1.bf16.msra.mxu0 %v686
  %1482 = vmatprep.subr.bf16.mxu0 0
  %1483 = vmatpush1.bf16.msra.mxu0 0
  %1484 = vmatprep.subr.bf16.mxu0 0
  %1485 = vmatpush1.bf16.msra.mxu0 0
  %1486 = vmatprep.subr.bf16.mxu0 0
  %1487 = vmatpush1.bf16.msra.mxu0 0
  %1488 = vmatprep.subr.bf16.mxu0 0
  %1489 = vmatpush1.bf16.msra.mxu0 0
  %1490 = vmatprep.subr.bf16.mxu0 0
  %1491 = vmatpush1.bf16.msra.mxu0 0
  %1492 = vmatprep.subr.bf16.mxu0 0
  %1493 = vmatpush1.bf16.msra.mxu0 0
  %1494 = vmatprep.subr.bf16.mxu0 0
  %1495 = vmatpush1.bf16.msra.mxu0 0
  %1496 = vmatprep.subr.bf16.mxu0 0
  %1497 = vmatpush1.bf16.msra.mxu0 0
  %1498 = vmatprep.mubr.bf16.mxu0 0
  %1499 = vmatmul.mubr.bf16.gmra.mrb[0].mxu0 %v1423
  %v1500 = vpop.f32.mrb[0].mxu0
  %v1501 = vadd.f32 0.0, %v1500
  %v1502 = vpop.f32.mrb[0].mxu0
  %v1503 = vadd.f32 0.0, %v1502
  %v1504 = vpop.f32.mrb[0].mxu0
  %v1505 = vpop.f32.mrb[0].mxu0
  %1506 = vdwg.mxu0
  %v1511 = vrot.slane %v1460, 4
  %v1512 = vrot.slane %v1462, 4
  %v1513 = vrot.slane %v1501, 4
  %v1514 = vrot.slane %v1503, 4
  %v1519 = vadd.f32 %v481, %v1511
  %v1520 = vadd.f32 %v483, %v1512
  %v1521 = vadd.f32 %v524, %v1513
  %v1522 = vadd.f32 %v526, %v1514
  %v1523 = vmul.f32 %v1519, 0.5
  %v1524 = vmul.f32 %v1520, 0.5
  %v1525 = vmul.f32 %v1521, 0.5
  %v1526 = vtanh.pop %v1523
  %v1527 = vtanh.pop %v1524
  %v1528 = vtanh.pop %v1525
  %v1529 = vmul.f32 %v1526, 0.5
  %v1530 = vmul.f32 %v1527, 0.5
  %v1531 = vmul.f32 %v1528, 0.5
  %v1532 = vadd.f32 %v1529, 0.5
  %v1533 = vadd.f32 %v1530, 0.5
  %v1534 = vadd.f32 %v1531, 0.5
  %v1535 = vtanh.pop %v1522
  %v1537 = vrot.slane %v1418, 6
  %v1539 = vmul.f32 %v1533, %v1537
  %v1540 = vmul.f32 %v1532, %v1535
  %v1541 = vadd.f32 %v1539, %v1540
  %v1542 = vtanh.pop %v1541
  %v1543 = vmul.f32 %v1534, %v1542
  %v1544 = vpack.c.bf16 %v1543, %v1543
  %v1546 = vrot.slane %v1544, 2
  %1548 = vmatprep.subr.bf16.mxu0 %v657
  %1549 = vmatpush1.bf16.msra.mxu0 %v656
  %1550 = vmatprep.subr.bf16.mxu0 %v661
  %1551 = vmatpush1.bf16.msra.mxu0 %v660
  %1552 = vmatprep.subr.bf16.mxu0 %v665
  %1553 = vmatpush1.bf16.msra.mxu0 %v664
  %1554 = vmatprep.subr.bf16.mxu0 %v669
  %1555 = vmatpush1.bf16.msra.mxu0 %v668
  %1556 = vmatprep.subr.bf16.mxu0 %v673
  %1557 = vmatpush1.bf16.msra.mxu0 %v672
  %1558 = vmatprep.subr.bf16.mxu0 %v677
  %1559 = vmatpush1.bf16.msra.mxu0 %v676
  %1560 = vmatprep.subr.bf16.mxu0 %v681
  %1561 = vmatpush1.bf16.msra.mxu0 %v680
  %1562 = vmatprep.subr.bf16.mxu0 %v685
  %1563 = vmatpush1.bf16.msra.mxu0 %v684
  %1564 = vmatprep.subr.bf16.mxu0 0
  %1565 = vmatpush1.bf16.msra.mxu0 0
  %1566 = vmatprep.subr.bf16.mxu0 0
  %1567 = vmatpush1.bf16.msra.mxu0 0
  %1568 = vmatprep.subr.bf16.mxu0 0
  %1569 = vmatpush1.bf16.msra.mxu0 0
  %1570 = vmatprep.subr.bf16.mxu0 0
  %1571 = vmatpush1.bf16.msra.mxu0 0
  %1572 = vmatprep.subr.bf16.mxu0 0
  %1573 = vmatpush1.bf16.msra.mxu0 0
  %1574 = vmatprep.subr.bf16.mxu0 0
  %1575 = vmatpush1.bf16.msra.mxu0 0
  %1576 = vmatprep.subr.bf16.mxu0 0
  %1577 = vmatpush1.bf16.msra.mxu0 0
  %1578 = vmatprep.subr.bf16.mxu0 0
  %1579 = vmatpush1.bf16.msra.mxu0 0
  %1580 = vmatprep.mubr.bf16.mxu0 0
  %1581 = vmatmul.mubr.bf16.gmra.mrb[0].mxu0 %v1546
  %v1582 = vpop.f32.mrb[0].mxu0
  %v1583 = vadd.f32 0.0, %v1582
  %v1584 = vpop.f32.mrb[0].mxu0
  %v1585 = vadd.f32 0.0, %v1584
  %v1586 = vpop.f32.mrb[0].mxu0
  %v1587 = vpop.f32.mrb[0].mxu0
  %1588 = vdwg.mxu0
  %1589 = vmatprep.subr.bf16.mxu0 %v659
  %1590 = vmatpush1.bf16.msra.mxu0 %v658
  %1591 = vmatprep.subr.bf16.mxu0 %v663
  %1592 = vmatpush1.bf16.msra.mxu0 %v662
  %1593 = vmatprep.subr.bf16.mxu0 %v667
  %1594 = vmatpush1.bf16.msra.mxu0 %v666
  %1595 = vmatprep.subr.bf16.mxu0 %v671
  %1596 = vmatpush1.bf16.msra.mxu0 %v670
  %1597 = vmatprep.subr.bf16.mxu0 %v675
  %1598 = vmatpush1.bf16.msra.mxu0 %v674
  %1599 = vmatprep.subr.bf16.mxu0 %v679
  %1600 = vmatpush1.bf16.msra.mxu0 %v678
  %1601 = vmatprep.subr.bf16.mxu0 %v683
  %1602 = vmatpush1.bf16.msra.mxu0 %v682
  %1603 = vmatprep.subr.bf16.mxu0 %v687
  %1604 = vmatpush1.bf16.msra.mxu0 %v686
  %1605 = vmatprep.subr.bf16.mxu0 0
  %1606 = vmatpush1.bf16.msra.mxu0 0
  %1607 = vmatprep.subr.bf16.mxu0 0
  %1608 = vmatpush1.bf16.msra.mxu0 0
  %1609 = vmatprep.subr.bf16.mxu0 0
  %1610 = vmatpush1.bf16.msra.mxu0 0
  %1611 = vmatprep.subr.bf16.mxu0 0
  %1612 = vmatpush1.bf16.msra.mxu0 0
  %1613 = vmatprep.subr.bf16.mxu0 0
  %1614 = vmatpush1.bf16.msra.mxu0 0
  %1615 = vmatprep.subr.bf16.mxu0 0
  %1616 = vmatpush1.bf16.msra.mxu0 0
  %1617 = vmatprep.subr.bf16.mxu0 0
  %1618 = vmatpush1.bf16.msra.mxu0 0
  %1619 = vmatprep.subr.bf16.mxu0 0
  %1620 = vmatpush1.bf16.msra.mxu0 0
  %1621 = vmatprep.mubr.bf16.mxu0 0
  %1622 = vmatmul.mubr.bf16.gmra.mrb[0].mxu0 %v1546
  %v1623 = vpop.f32.mrb[0].mxu0
  %v1624 = vadd.f32 0.0, %v1623
  %v1625 = vpop.f32.mrb[0].mxu0
  %v1626 = vadd.f32 0.0, %v1625
  %v1627 = vpop.f32.mrb[0].mxu0
  %v1628 = vpop.f32.mrb[0].mxu0
  %1629 = vdwg.mxu0
  %v1634 = vrot.slane %v1583, 2
  %v1635 = vrot.slane %v1585, 2
  %v1636 = vrot.slane %v1624, 2
  %v1637 = vrot.slane %v1626, 2
  %v1642 = vadd.f32 %v481, %v1634
  %v1643 = vadd.f32 %v483, %v1635
  %v1644 = vadd.f32 %v524, %v1636
  %v1645 = vadd.f32 %v526, %v1637
  %v1646 = vmul.f32 %v1642, 0.5
  %v1647 = vmul.f32 %v1643, 0.5
  %v1648 = vmul.f32 %v1644, 0.5
  %v1649 = vtanh.pop %v1646
  %v1650 = vtanh.pop %v1647
  %v1651 = vtanh.pop %v1648
  %v1652 = vmul.f32 %v1649, 0.5
  %v1653 = vmul.f32 %v1650, 0.5
  %v1654 = vmul.f32 %v1651, 0.5
  %v1655 = vadd.f32 %v1652, 0.5
  %v1656 = vadd.f32 %v1653, 0.5
  %v1657 = vadd.f32 %v1654, 0.5
  %v1658 = vtanh.pop %v1645
  %v1660 = vrot.slane %v1541, 6
  %v1662 = vmul.f32 %v1656, %v1660
  %v1663 = vmul.f32 %v1655, %v1658
  %v1664 = vadd.f32 %v1662, %v1663
  %v1665 = vtanh.pop %v1664
  %v1666 = vmul.f32 %v1657, %v1665
  %vm1667 = vcmask 1041408
  %v1668 = vsel %vm1667, %v823, %v943
  %vm1669 = vcmask 1043456
  %v1670 = vsel %vm1669, %v1668, %v1066
  %vm1671 = vcmask 1045504
  %v1672 = vsel %vm1671, %v1670, %v1189
  %v1673 = vsel %vm1667, %v1300, %v1420
  %v1674 = vsel %vm1669, %v1673, %v1543
  %v1675 = vsel %vm1671, %v1674, %v1666
  %v1676 = vpack.c.bf16 %v1675, %v1672
  %v1677 = vld [vmem:[%s4] sm:$0xf]
  %v1678 = vld [vmem:[%s4 + $0x4] sm:$0xf]
  %v1679 = vld [vmem:[%s4 + $0x8] sm:$0xf]
  %v1680 = vld [vmem:[%s4 + $0xc] sm:$0xf]
  %v1681 = vld [vmem:[%s4 + $0x10] sm:$0xf]
  %v1682 = vld [vmem:[%s4 + $0x14] sm:$0xf]
  %v1683 = vld [vmem:[%s4 + $0x18] sm:$0xf]
  %v1684 = vld [vmem:[%s4 + $0x1c] sm:$0xf]
  %v1685 = vld [vmem:[%s4 + $0x20] sm:$0xf]
  %v1686 = vld [vmem:[%s4 + $0x24] sm:$0xf]
  %v1687 = vld [vmem:[%s4 + $0x28] sm:$0xf]
  %v1688 = vld [vmem:[%s4 + $0x2c] sm:$0xf]
  %v1689 = vld [vmem:[%s4 + $0x30] sm:$0xf]
  %v1690 = vld [vmem:[%s4 + $0x34] sm:$0xf]
  %v1691 = vld [vmem:[%s4 + $0x38] sm:$0xf]
  %v1692 = vld [vmem:[%s4 + $0x3c] sm:$0xf]
  %v1693 = vld [vmem:[%s5] sm:$0x1]
  %v1695 = vlaneseq
  %v1696 = vshrl.u32 %v1695, 7
  %v1697 = vsub.s32 0, %v1696
  %v1698 = vrot.slane %v1693, %v1697
  %v1716 = vunpack.c.l.b16 %v1677
  %v1717 = vunpack.c.l.b16 %v1678
  %v1718 = vunpack.c.l.b16 %v1679
  %v1719 = vunpack.c.l.b16 %v1680
  %v1720 = vunpack.c.l.b16 %v1681
  %v1721 = vunpack.c.l.b16 %v1682
  %v1722 = vunpack.c.l.b16 %v1683
  %v1723 = vunpack.c.l.b16 %v1684
  %v1724 = vunpack.c.l.b16 %v1685
  %v1725 = vunpack.c.l.b16 %v1686
  %v1726 = vunpack.c.l.b16 %v1687
  %v1727 = vunpack.c.l.b16 %v1688
  %v1728 = vunpack.c.l.b16 %v1689
  %v1729 = vunpack.c.l.b16 %v1690
  %v1730 = vunpack.c.l.b16 %v1691
  %v1731 = vunpack.c.l.b16 %v1692
  %v1732 = vpack.c.b16 %v1717, %v1716
  %v1733 = vpack.c.b16 %v1719, %v1718
  %v1734 = vpack.c.b16 %v1721, %v1720
  %v1735 = vpack.c.b16 %v1723, %v1722
  %v1736 = vpack.c.b16 %v1725, %v1724
  %v1737 = vpack.c.b16 %v1727, %v1726
  %v1738 = vpack.c.b16 %v1729, %v1728
  %v1739 = vpack.c.b16 %v1731, %v1730
  %1748 = vmatprep.subr.bf16.mxu0 0
  %1749 = vmatpush1.bf16.msra.mxu0 %v1732
  %1750 = vmatprep.subr.bf16.mxu0 0
  %1751 = vmatpush1.bf16.msra.mxu0 %v1733
  %1752 = vmatprep.subr.bf16.mxu0 0
  %1753 = vmatpush1.bf16.msra.mxu0 %v1734
  %1754 = vmatprep.subr.bf16.mxu0 0
  %1755 = vmatpush1.bf16.msra.mxu0 %v1735
  %1756 = vmatprep.subr.bf16.mxu0 0
  %1757 = vmatpush1.bf16.msra.mxu0 %v1736
  %1758 = vmatprep.subr.bf16.mxu0 0
  %1759 = vmatpush1.bf16.msra.mxu0 %v1737
  %1760 = vmatprep.subr.bf16.mxu0 0
  %1761 = vmatpush1.bf16.msra.mxu0 %v1738
  %1762 = vmatprep.subr.bf16.mxu0 0
  %1763 = vmatpush1.bf16.msra.mxu0 %v1739
  %1764 = vmatprep.subr.bf16.mxu0 0
  %1765 = vmatpush1.bf16.msra.mxu0 0
  %1766 = vmatprep.subr.bf16.mxu0 0
  %1767 = vmatpush1.bf16.msra.mxu0 0
  %1768 = vmatprep.subr.bf16.mxu0 0
  %1769 = vmatpush1.bf16.msra.mxu0 0
  %1770 = vmatprep.subr.bf16.mxu0 0
  %1771 = vmatpush1.bf16.msra.mxu0 0
  %1772 = vmatprep.subr.bf16.mxu0 0
  %1773 = vmatpush1.bf16.msra.mxu0 0
  %1774 = vmatprep.subr.bf16.mxu0 0
  %1775 = vmatpush1.bf16.msra.mxu0 0
  %1776 = vmatprep.subr.bf16.mxu0 0
  %1777 = vmatpush1.bf16.msra.mxu0 0
  %1778 = vmatprep.subr.bf16.mxu0 0
  %1779 = vmatpush1.bf16.msra.mxu0 0
  %1780 = vmatprep.mubr.bf16.mxu0 0
  %1781 = vmatmul.mubr.bf16.gmra.mrb[0].mxu0 %v1676
  %v1782 = vpop.f32.mrb[0].mxu0
  %v1783 = vadd.f32 %v1698, %v1782
  %v1784 = vpop.f32.mrb[0].mxu0
  %v1785 = vpop.f32.mrb[0].mxu0
  %v1786 = vadd.f32 %v1698, %v1785
  %v1787 = vpop.f32.mrb[0].mxu0
  %1788 = vdwg.mxu0
  %1789 = vst [vmem:[%s6] sm:$0xff] %v1783
  %1790 = vst [vmem:[%s6 + $0x8] sm:$0xff] %v1786
  // Predicated region
  $region26: #{classifier_forward.1} parent=0 // pred_check
    _
  $region27: #{classifier_forward.1} parent=0 // pred_check_branch
    %1792 = sbr.rel (0) target = $region29
  $region28: #{classifier_forward.1} parent=0 // pred_region
    _
  $region29: #{classifier_forward.1} parent=0 // pred_fallthru
    _
  // Predicated region
  $region30: #{classifier_forward.1} parent=0 // pred_check
    _
  $region31: #{classifier_forward.1} parent=0 // pred_check_branch
    %1794 = sbr.rel (0) target = $region33
  $region32: #{classifier_forward.1} parent=0 // pred_region
    _
  $region33: #{classifier_forward.1} parent=0 // pred_fallthru
    _

</llo_original>
